<compile_context>
chip_gen: v6e
topology: v6e:2x2x1
jax: 0.10.0
libtpu: 0.0.40
codegen_flags: <defaults>
</compile_context>

<pallas_src>
import functools
import numpy as np
import jax
import jax.numpy as jnp
from jax.experimental import pallas as pl
from jax.experimental.pallas import tpu as pltpu

F32 = jnp.float32
BF16 = jnp.bfloat16

_TM_MAX, _TN_MAX, _TK_MAX = 512, 512, 2048   # adaptive per-layer caps


def _round_up(x, m):
    return (x + m - 1) // m * m


@functools.lru_cache(maxsize=None)
def _vmem_limit_bytes():
    """Generation-aware scoped VMEM limit (3/4 of physical, capped)."""
    default = 48 * 1024 * 1024
    try:
        info = pltpu.get_tpu_info()
        cap = getattr(info, "vmem_capacity_bytes", None)
        if not cap:
            return default
        return int(max(32 * 1024 * 1024,
                       min(cap * 3 // 4, 100 * 1024 * 1024)))
    except Exception:
        return default


def _cparams(*sem):
    return pltpu.CompilerParams(dimension_semantics=sem,
                                vmem_limit_bytes=_vmem_limit_bytes())


def _pick_tile(dim, cap, align):
    """Largest multiple-of-`align` divisor of `dim` <= cap; if `dim` is not a
    multiple of `align`, use the full dim as one block (allowed on TPU)."""
    if dim % align != 0:
        return dim
    t = min(cap, dim)
    t -= t % align
    while dim % t != 0:
        t -= align
    return t


# ------------------------------ Pallas kernels ------------------------------
def _mm_kernel(*refs, act, has_bias, has_res):
    """Tiled matmul with f32 accumulator; fused bias/residual/activation epilogue."""
    a_ref, b_ref = refs[0], refs[1]
    idx = 2
    bias_ref = res_ref = None
    if has_bias:
        bias_ref = refs[idx]; idx += 1
    if has_res:
        res_ref = refs[idx]; idx += 1
    o_ref, acc_ref = refs[idx], refs[idx + 1]

    @pl.when(pl.program_id(2) == 0)
    def _():
        acc_ref[...] = jnp.zeros_like(acc_ref)

    acc_ref[...] += jnp.dot(a_ref[...], b_ref[...],
                            preferred_element_type=jnp.float32)

    @pl.when(pl.program_id(2) == pl.num_programs(2) - 1)
    def _():
        y = acc_ref[...]
        if has_bias:
            y = y + bias_ref[...].astype(jnp.float32)
        if has_res:
            y = y + res_ref[...].astype(jnp.float32)
        if act == "relu":
            y = jnp.maximum(y, 0.0)
        elif act == "sigmoid":
            y = jax.nn.sigmoid(y)
        o_ref[...] = y.astype(o_ref.dtype)


def _head_kernel(a_ref, b1_ref, bias1_ref, b2_ref, bias2_ref, o_ref, acc_ref):
    """3x3-conv matmul (+bias+ReLU) with the trailing small 1x1 conv fused in
    the k==last epilogue: out = relu(A@B1 + b1) @ B2 + b2."""
    @pl.when(pl.program_id(1) == 0)
    def _():
        acc_ref[...] = jnp.zeros_like(acc_ref)

    acc_ref[...] += jnp.dot(a_ref[...], b1_ref[...],
                            preferred_element_type=jnp.float32)

    @pl.when(pl.program_id(1) == pl.num_programs(1) - 1)
    def _():
        y = jnp.maximum(acc_ref[...] + bias1_ref[...].astype(jnp.float32), 0.0)
        z = jnp.dot(y.astype(BF16), b2_ref[...],
                    preferred_element_type=jnp.float32)
        o_ref[...] = (z + bias2_ref[...].astype(jnp.float32)).astype(o_ref.dtype)


def _max9_kernel(*refs):
    """Elementwise max of 9 tap views (fused 3x3/s2 maxpool reduction)."""
    o_ref = refs[-1]
    m = refs[0][...]
    for r in refs[1:-1]:
        m = jnp.maximum(m, r[...])
    o_ref[...] = m


def _gap_kernel(x_ref, o_ref):
    """Global average pool over the flattened spatial axis (f32 accumulation)."""
    o_ref[...] = jnp.mean(x_ref[...].astype(jnp.float32), axis=1)


# ----------------------------- Matmul wrappers --------------------------------
def _matmul(a, b, bias=None, residual=None, *, act="none", out_dtype=BF16):
    """act(a @ b + bias + residual); bf16 operands, f32 accumulation, ragged-M
    tiled grid (no pad/slice HBM copies)."""
    M, K = a.shape
    _, N = b.shape
    m_orig = M
    if M < 8:                                    # tiny matmuls (e.g. pooled (batch,C))
        a = jnp.pad(a, ((0, 8 - M), (0, 0)))
        if residual is not None:
            residual = jnp.pad(residual, ((0, 8 - M), (0, 0)))
        M = 8

    tm = min(_TM_MAX, _round_up(M, 8))
    tn = _pick_tile(N, _TN_MAX, 128)
    tk = _pick_tile(K, _TK_MAX, 128)
    gm, gn, gk = pl.cdiv(M, tm), N // tn, K // tk
    # v7x megacore: make sure at least one "parallel" axis has >= 2 blocks.
    if gm == 1 and gn == 1 and tn % 256 == 0:
        tn //= 2
        gn = N // tn

    ops = [a.astype(BF16), b.astype(BF16)]
    in_specs = [pl.BlockSpec((tm, tk), lambda i, j, k: (i, k)),
                pl.BlockSpec((tk, tn), lambda i, j, k: (k, j))]
    if bias is not None:
        ops.append(bias.reshape(1, N).astype(F32))
        in_specs.append(pl.BlockSpec((1, tn), lambda i, j, k: (0, j)))
    if residual is not None:
        ops.append(residual.astype(BF16))
        in_specs.append(pl.BlockSpec((tm, tn), lambda i, j, k: (i, j)))

    out = pl.pallas_call(
        functools.partial(_mm_kernel, act=act,
                          has_bias=bias is not None,
                          has_res=residual is not None),
        out_shape=jax.ShapeDtypeStruct((M, N), out_dtype),
        grid_spec=pltpu.PrefetchScalarGridSpec(
            num_scalar_prefetch=0,
            grid=(gm, gn, gk),
            in_specs=in_specs,
            out_specs=pl.BlockSpec((tm, tn), lambda i, j, k: (i, j)),
            scratch_shapes=[pltpu.VMEM((tm, tn), jnp.float32)]),
        compiler_params=_cparams("parallel", "parallel", "arbitrary"),
    )(*ops)
    return out[:m_orig] if m_orig != M else out


def _matmul_fused_head(a, b1, bias1, b2, bias2, out_dtype=BF16):
    """relu(a @ b1 + bias1) @ b2 + bias2 in one pallas_call (fused head)."""
    M, K = a.shape
    _, N1 = b1.shape
    _, N2 = b2.shape
    m_orig = M
    if M < 8:
        a = jnp.pad(a, ((0, 8 - M), (0, 0)))
        M = 8
    tm = min(_TM_MAX, _round_up(M, 8))
    tk = _pick_tile(K, _TK_MAX, 128)
    out = pl.pallas_call(
        _head_kernel,
        out_shape=jax.ShapeDtypeStruct((M, N2), out_dtype),
        grid_spec=pltpu.PrefetchScalarGridSpec(
            num_scalar_prefetch=0,
            grid=(pl.cdiv(M, tm), K // tk),
            in_specs=[pl.BlockSpec((tm, tk), lambda i, k: (i, k)),
                      pl.BlockSpec((tk, N1), lambda i, k: (k, 0)),
                      pl.BlockSpec((1, N1), lambda i, k: (0, 0)),
                      pl.BlockSpec((N1, N2), lambda i, k: (0, 0)),
                      pl.BlockSpec((1, N2), lambda i, k: (0, 0))],
            out_specs=pl.BlockSpec((tm, N2), lambda i, k: (i, 0)),
            scratch_shapes=[pltpu.VMEM((tm, N1), jnp.float32)]),
        compiler_params=_cparams("parallel", "arbitrary"),
    )(a.astype(BF16), b1.astype(BF16), bias1.reshape(1, N1).astype(F32),
      b2.astype(BF16), bias2.reshape(1, N2).astype(F32))
    return out[:m_orig] if m_orig != M else out


# --------------------------------- Conv glue ---------------------------------
def _im2col(x, kh, kw, stride, dilation, padding):
    """x: (N,H,W,C) -> patches (N*Ho*Wo, kh*kw*C), feature index = (i*kw+j)*C+c."""
    # TODO(synk): replace with in-kernel tap accumulation (read the padded NHWC
    # activation once) to cut HBM traffic ~3x on 3x3/dilated convs.
    N, H, W, C = x.shape
    Ho = (H + 2 * padding - dilation * (kh - 1) - 1) // stride + 1
    Wo = (W + 2 * padding - dilation * (kw - 1) - 1) // stride + 1
    xp = jnp.pad(x, ((0, 0), (padding, padding), (padding, padding), (0, 0))) \
        if padding else x
    taps = []
    for i in range(kh):
        for j in range(kw):
            di, dj = i * dilation, j * dilation
            taps.append(jax.lax.slice(
                xp, (0, di, dj, 0),
                (N, di + (Ho - 1) * stride + 1, dj + (Wo - 1) * stride + 1, C),
                (1, stride, stride, 1)))
    patches = jnp.concatenate(taps, axis=-1) if len(taps) > 1 else taps[0]
    return patches.reshape(N * Ho * Wo, kh * kw * C), (N, Ho, Wo)


def conv2d(x, p, *, stride=1, dilation=1, padding=0, act="none", residual=None):
    """Conv (HWIO weights) + folded-BN bias + optional residual + activation."""
    kh, kw, cin, cout = p["w"].shape
    patches, (N, Ho, Wo) = _im2col(x, kh, kw, stride, dilation, padding)
    w2 = p["w"].reshape(kh * kw * cin, cout)
    res = None if residual is None else residual.reshape(N * Ho * Wo, cout)
    y = _matmul(patches, w2, p["b"], residual=res, act=act, out_dtype=BF16)
    return y.reshape(N, Ho, Wo, cout)


def _conv_head_fused(x, p_conv, p_final, *, padding=1):
    """3x3 conv + BN(bias) + ReLU fused with the trailing cout=3 1x1 conv."""
    kh, kw, cin, cmid = p_conv["w"].shape
    patches, (N, Ho, Wo) = _im2col(x, kh, kw, 1, 1, padding)
    w1 = p_conv["w"].reshape(kh * kw * cin, cmid)
    cout = p_final["w"].shape[-1]
    coutp = _round_up(max(cout, 128), 128)          # lane-dense head output
    w2 = jnp.zeros((cmid, coutp), BF16).at[:, :cout].set(
        p_final["w"].reshape(cmid, cout).astype(BF16))
    b2 = jnp.zeros((coutp,), F32).at[:cout].set(p_final["b"].astype(F32))
    y = _matmul_fused_head(patches, w1, p_conv["b"], w2, b2)
    return y[:, :cout].reshape(N, Ho, Wo, cout)


def _maxpool_3x3_s2_p1(x):
    # PyTorch MaxPool2d pads with -inf; use a large negative constant.
    # TODO(synk): taps are still materialized by XLA (no in-kernel strided read).
    N, H, W, C = x.shape
    Ho = (H + 2 - 3) // 2 + 1
    Wo = (W + 2 - 3) // 2 + 1
    xp = jnp.pad(x, ((0, 0), (1, 1), (1, 1), (0, 0)), constant_values=-1e30)
    T = N * Ho * Wo * C
    # Lane-dense layout: present a 128-wide last dim so stores are unmasked.
    flat_shape = (T // 128, 128) if T % 128 == 0 else (N * Ho * Wo, C)
    taps = []
    for i in range(3):
        for j in range(3):
            t = jax.lax.slice(xp, (0, i, j, 0),
                              (N, i + (Ho - 1) * 2 + 1, j + (Wo - 1) * 2 + 1, C),
                              (1, 2, 2, 1))
            taps.append(t.reshape(flat_shape))
    R, Cc = flat_shape
    tr = min(1024, _round_up(R, 8))
    out = pl.pallas_call(
        _max9_kernel,
        out_shape=jax.ShapeDtypeStruct(flat_shape, x.dtype),
        grid_spec=pltpu.PrefetchScalarGridSpec(
            num_scalar_prefetch=0, grid=(pl.cdiv(R, tr),),
            in_specs=[pl.BlockSpec((tr, Cc), lambda i: (i, 0)) for _ in range(9)],
            out_specs=pl.BlockSpec((tr, Cc), lambda i: (i, 0))),
        compiler_params=_cparams("parallel"),
    )(*taps)
    return out.reshape(N, Ho, Wo, C)


def _global_avg_pool(x):
    """AdaptiveAvgPool2d(1): (N,H,W,C) -> (N,C) in f32."""
    N, H, W, C = x.shape
    xr = x.reshape(N, H * W, C)
    tc = 128 if C % 128 == 0 else C      # keep per-step blocks small (v7x VMEM)
    return pl.pallas_call(
        _gap_kernel,
        out_shape=jax.ShapeDtypeStruct((N, C), F32),
        grid_spec=pltpu.PrefetchScalarGridSpec(
            num_scalar_prefetch=0, grid=(C // tc,),
            in_specs=[pl.BlockSpec((N, H * W, tc), lambda c: (0, 0, c))],
            out_specs=pl.BlockSpec((N, tc), lambda c: (0, c))),
        compiler_params=_cparams("parallel"),
    )(xr)


# ------------------------------- Upsampling ----------------------------------
def _bilinear_matrix(out_size, in_size):
    """Matches F.interpolate(mode='bilinear', align_corners=False)."""
    i = np.arange(out_size, dtype=np.float64)
    src = (i + 0.5) * (in_size / out_size) - 0.5
    src = np.clip(src, 0.0, in_size - 1)
    i0 = np.floor(src).astype(np.int64)
    i1 = np.minimum(i0 + 1, in_size - 1)
    w1 = (src - i0).astype(np.float32)
    w0 = 1.0 - w1
    Wm = np.zeros((out_size, in_size), dtype=np.float32)
    Wm[np.arange(out_size), i0] += w0
    Wm[np.arange(out_size), i1] += w1
    return jnp.asarray(Wm)


@functools.partial(jax.jit, static_argnums=(1, 2))
def _upsample_sigmoid_nchw(x, out_h, out_w):
    """Bilinear (align_corners=False) upsample + fused sigmoid; emits NCHW f32."""
    N, Hi, Wi, C = x.shape
    Wh = _bilinear_matrix(out_h, Hi)                      # (out_h, Hi)
    Ww = _bilinear_matrix(out_w, Wi)                      # (out_w, Wi)
    # Height pass: (out_h, Hi) @ (Hi, N*Wi*C)
    xh = jnp.transpose(x, (1, 0, 2, 3)).reshape(Hi, N * Wi * C)
    y1 = _matmul(Wh, xh, act="none", out_dtype=BF16)
    y1 = y1.reshape(out_h, N, Wi, C)
    # Width pass: layout chosen so the output reshape lands directly in NCHW
    # with the full output width as the (lane-dense) last dim.
    y1 = jnp.transpose(y1, (1, 3, 0, 2)).reshape(N * C * out_h, Wi)
    y2 = _matmul(y1, Ww.T, act="sigmoid", out_dtype=F32)  # (N*C*out_h, out_w)
    return y2.reshape(N, C, out_h, out_w)


# ------------------------------ Parameters -----------------------------------
class ParamGen:
    def __init__(self, seed=0):
        self.rng = np.random.default_rng(seed)

    def conv(self, kh, kw, cin, cout):
        # Weights stored in bf16 (MXU operand dtype); bias = conv bias / folded
        # eval-mode BN affine kept in f32.
        w = self.rng.standard_normal((kh, kw, cin, cout), dtype=np.float32)
        w = w / np.sqrt(kh * kw * cin)
        b = 0.01 * self.rng.standard_normal((cout,), dtype=np.float32)
        return {"w": jnp.asarray(w, dtype=BF16), "b": jnp.asarray(b)}


def build_params(seed=0):
    pg = ParamGen(seed)
    P = {"stem": pg.conv(7, 7, 3, 64)}

    # ResNet-101 backbone, replace_stride_with_dilation=[False, True, True]
    inplanes, dilation = 64, 1
    layer_cfg = [("layer1", 64, 3, 1, False),
                 ("layer2", 128, 4, 2, False),
                 ("layer3", 256, 23, 2, True),
                 ("layer4", 512, 3, 2, True)]
    for name, planes, blocks, stride, dilate in layer_cfg:
        prev_dilation = dilation
        if dilate:
            dilation *= stride
            stride = 1
        blk_params, blk_cfg = [], []
        bp = {"conv1": pg.conv(1, 1, inplanes, planes),
              "conv2": pg.conv(3, 3, planes, planes),
              "conv3": pg.conv(1, 1, planes, planes * 4)}
        if stride != 1 or inplanes != planes * 4:
            bp["downsample"] = pg.conv(1, 1, inplanes, planes * 4)
        blk_params.append(bp)
        blk_cfg.append((stride, prev_dilation))
        inplanes = planes * 4
        for _ in range(1, blocks):
            blk_params.append({"conv1": pg.conv(1, 1, inplanes, planes),
                               "conv2": pg.conv(3, 3, planes, planes),
                               "conv3": pg.conv(1, 1, planes, planes * 4)})
            blk_cfg.append((1, dilation))
        P[name] = {"blocks": blk_params, "cfg": blk_cfg}

    # classifier = DeepLabHead(2048, 3): ASPP(rates 12,24,36) + 3x3 conv + 1x1 conv
    aspp = {"b0": pg.conv(1, 1, 2048, 256)}
    for i in range(3):
        aspp["b%d" % (i + 1)] = pg.conv(3, 3, 2048, 256)
    aspp["pool"] = pg.conv(1, 1, 2048, 256)
    aspp["project"] = pg.conv(1, 1, 5 * 256, 256)
    P["classifier"] = {"aspp": aspp,
                       "conv": pg.conv(3, 3, 256, 256),
                       "final": pg.conv(1, 1, 256, 3)}
    # aux_classifier = FCNHead(1024, 3)
    P["aux"] = {"conv": pg.conv(3, 3, 1024, 256),
                "final": pg.conv(1, 1, 256, 3)}
    return P


# --------------------------------- Forward ------------------------------------
@jax.jit
def _stem_stage(x_nchw, p_stem):
    x = jnp.transpose(x_nchw, (0, 2, 3, 1)).astype(BF16)   # NCHW -> NHWC, bf16
    x = conv2d(x, p_stem, stride=2, padding=3, act="relu")
    return _maxpool_3x3_s2_p1(x)


@functools.partial(jax.jit, static_argnums=(2, 3))
def _bottleneck(x, p, stride, dilation):
    identity = x
    out = conv2d(x, p["conv1"], act="relu")
    out = conv2d(out, p["conv2"], stride=stride, dilation=dilation,
                 padding=dilation, act="relu")
    if "downsample" in p:
        identity = conv2d(x, p["downsample"], stride=stride, act="none")
    # conv3 + (folded BN) + residual add + ReLU fused in the matmul epilogue.
    return conv2d(out, p["conv3"], act="relu", residual=identity)


def _aspp(x, P):
    N, H, W, C = x.shape
    branches = [conv2d(x, P["b0"], act="relu")]
    for i, rate in enumerate((12, 24, 36)):
        branches.append(conv2d(x, P["b%d" % (i + 1)], dilation=rate,
                               padding=rate, act="relu"))
    # global-average-pool branch: AdaptiveAvgPool2d(1) + 1x1 conv + ReLU.
    pooled = _global_avg_pool(x)                                       # (N, C) f32
    pooled = _matmul(pooled, P["pool"]["w"].reshape(C, 256),
                     P["pool"]["b"], act="relu", out_dtype=BF16)       # (N, 256)
    # Fold the pooled branch into the project conv as a per-sample additive
    # term: proj = relu(cat1024 @ Wp[:1024] + pooled @ Wp[1024:] + bp).
    Wproj = P["project"]["w"].reshape(5 * 256, 256)
    pooled_bias = _matmul(pooled, Wproj[4 * 256:], act="none")         # (N, 256)
    cat = jnp.concatenate(branches, axis=-1)                           # (N,H,W,1024)
    M = N * H * W
    res = jnp.broadcast_to(pooled_bias[:, None, None, :],
                           (N, H, W, 256)).reshape(M, 256)
    y = _matmul(cat.reshape(M, 4 * 256), Wproj[:4 * 256],
                P["project"]["b"], residual=res, act="relu")
    return y.reshape(N, H, W, 256)     # Dropout(0.5): identity (eval)


@jax.jit
def _classifier_head(x, P):
    x = _aspp(x, P["aspp"])
    # 3x3 conv + BN + ReLU fused with the final 1x1 (cout=3) conv.
    return _conv_head_fused(x, P["conv"], P["final"], padding=1)


@jax.jit
def _aux_head(x, P):
    # Dropout(0.1) between ReLU and the final 1x1 is identity in eval mode.
    return _conv_head_fused(x, P["conv"], P["final"], padding=1)


def deeplabv3_forward(x_nchw, P):
    N, C, H, W = x_nchw.shape
    x = _stem_stage(x_nchw, P["stem"])
    aux_feat = None
    for name in ("layer1", "layer2", "layer3", "layer4"):
        for bp, (s, d) in zip(P[name]["blocks"], P[name]["cfg"]):
            x = _bottleneck(x, bp, s, d)
        if name == "layer3":
            aux_feat = x
    out = _classifier_head(x, P["classifier"])
    aux = _aux_head(aux_feat, P["aux"])
    return {"out": _upsample_sigmoid_nchw(out, H, W),
            "aux": _upsample_sigmoid_nchw(aux, H, W)}


if __name__ == "__main__":
    key = jax.random.PRNGKey(0)
    # Small spatial size (multiple of 8 so the /8 backbone stride works).
    x = jax.random.normal(key, (2, 3, 32, 32), dtype=jnp.float32)
    params = build_params(seed=0)
    result = deeplabv3_forward(x, params)
    jax.block_until_ready(result["out"])
    jax.block_until_ready(result["aux"])
    assert result["out"].shape == (2, 3, 32, 32)
    assert result["aux"].shape == (2, 3, 32, 32)
    assert bool(jnp.all(jnp.isfinite(result["out"])))
    assert bool(jnp.all(jnp.isfinite(result["aux"])))
    print("KERNEL_OK")
</pallas_src>

<mosaic_0001>
module attributes {stable_mosaic.version = 11 : i64} {
  func.func @_mm_kernel(%arg0: i32, %arg1: i32, %arg2: i32, %arg3: memref<512x147xbf16, #tpu.memory_space<vmem>>, %arg4: memref<147x64xbf16, #tpu.memory_space<vmem>>, %arg5: memref<1x64xf32, #tpu.memory_space<vmem>>, %arg6: memref<512x64xbf16, #tpu.memory_space<vmem>>, %arg7: memref<512x64xf32, #tpu.memory_space<vmem>>) attributes {dimension_semantics = [#tpu.dimension_semantics<parallel>, #tpu.dimension_semantics<parallel>, #tpu.dimension_semantics<arbitrary>], iteration_bounds = array<i64: 1, 1, 1>, scalar_prefetch = 0 : i64, scratch_operands = 1 : i64, tpu.core_type = #tpu.core_type<tc>, window_params = [{transform_indices = @transform_0, window_bounds = array<i64: 512, 147>}, {transform_indices = @transform_1, window_bounds = array<i64: 147, 64>}, {transform_indices = @transform_2, window_bounds = array<i64: 1, 64>}, {transform_indices = @transform_3, window_bounds = array<i64: 512, 64>}]} {
    %c0_i32 = arith.constant 0 : i32
    %0 = arith.cmpi eq, %arg2, %c0_i32 : i32
    %1 = arith.extui %0 : i1 to i32
    %c0_i32_0 = arith.constant 0 : i32
    %2 = arith.cmpi ne, %1, %c0_i32_0 : i32
    scf.if %2 {
      %cst_10 = arith.constant 0.000000e+00 : f32
      %12 = vector.broadcast %cst_10 : f32 to vector<512x64xf32>
      %c0_11 = arith.constant 0 : index
      %c0_12 = arith.constant 0 : index
      %13 = vector.load %arg7[%c0_11, %c0_12] : memref<512x64xf32, #tpu.memory_space<vmem>>, vector<512x64xf32>
      tpu.vector_store %arg7[%c0_11, %c0_12], %12 {strides = array<i32>} : memref<512x64xf32, #tpu.memory_space<vmem>>, vector<512x64xf32>,
    } else {
    }
    %c0 = arith.constant 0 : index
    %c0_1 = arith.constant 0 : index
    %3 = vector.load %arg7[%c0, %c0_1] : memref<512x64xf32, #tpu.memory_space<vmem>>, vector<512x64xf32>
    %c0_2 = arith.constant 0 : index
    %c0_3 = arith.constant 0 : index
    %4 = vector.load %arg3[%c0_2, %c0_3] : memref<512x147xbf16, #tpu.memory_space<vmem>>, vector<512x147xbf16>
    %c0_4 = arith.constant 0 : index
    %c0_5 = arith.constant 0 : index
    %5 = vector.load %arg4[%c0_4, %c0_5] : memref<147x64xbf16, #tpu.memory_space<vmem>>, vector<147x64xbf16>
    %cst = arith.constant dense<0.000000e+00> : vector<512x64xf32>
    %6 = tpu.matmul %4, %5, %cst {dimension_numbers = #tpu.dot_dimension_numbers<[1], [0], [0], [1], [0, 0, 1, 1], [], []>} : vector<512x147xbf16>, vector<147x64xbf16>, vector<512x64xf32> -> vector<512x64xf32>
    %7 = arith.addf %3, %6 : vector<512x64xf32>
    %c0_6 = arith.constant 0 : index
    %c0_7 = arith.constant 0 : index
    %8 = vector.load %arg7[%c0_6, %c0_7] : memref<512x64xf32, #tpu.memory_space<vmem>>, vector<512x64xf32>
    tpu.vector_store %arg7[%c0_6, %c0_7], %7 {strides = array<i32>} : memref<512x64xf32, #tpu.memory_space<vmem>>, vector<512x64xf32>,
    %c0_i32_8 = arith.constant 0 : i32
    %9 = arith.cmpi eq, %arg2, %c0_i32_8 : i32
    %10 = arith.extui %9 : i1 to i32
    %c0_i32_9 = arith.constant 0 : i32
    %11 = arith.cmpi ne, %10, %c0_i32_9 : i32
    scf.if %11 {
      %c0_10 = arith.constant 0 : index
      %c0_11 = arith.constant 0 : index
      %12 = vector.load %arg7[%c0_10, %c0_11] : memref<512x64xf32, #tpu.memory_space<vmem>>, vector<512x64xf32>
      %c0_12 = arith.constant 0 : index
      %c0_13 = arith.constant 0 : index
      %13 = vector.load %arg5[%c0_12, %c0_13] : memref<1x64xf32, #tpu.memory_space<vmem>>, vector<1x64xf32>
      %14 = vector.broadcast %13 : vector<1x64xf32> to vector<512x64xf32>
      %15 = arith.addf %12, %14 : vector<512x64xf32>
      %cst_14 = arith.constant 0.000000e+00 : f32
      %16 = vector.broadcast %cst_14 : f32 to vector<512x64xf32>
      %17 = arith.maximumf %15, %16 : vector<512x64xf32>
      %18 = arith.truncf %17 : vector<512x64xf32> to vector<512x64xbf16>
      %c0_15 = arith.constant 0 : index
      %c0_16 = arith.constant 0 : index
      %19 = vector.load %arg6[%c0_15, %c0_16] : memref<512x64xbf16, #tpu.memory_space<vmem>>, vector<512x64xbf16>
      tpu.vector_store %arg6[%c0_15, %c0_16], %18 {strides = array<i32>} : memref<512x64xbf16, #tpu.memory_space<vmem>>, vector<512x64xbf16>,
    } else {
    }
    return
  }
  func.func @transform_0(%arg0: i32, %arg1: i32, %arg2: i32) -> (i32, i32) {
    %c0_i32 = arith.constant 0 : i32
    return %arg0, %arg2 : i32, i32
  }
  func.func @transform_1(%arg0: i32, %arg1: i32, %arg2: i32) -> (i32, i32) {
    %c0_i32 = arith.constant 0 : i32
    return %arg2, %arg1 : i32, i32
  }
  func.func @transform_2(%arg0: i32, %arg1: i32, %arg2: i32) -> (i32, i32) {
    %c0_i32 = arith.constant 0 : i32
    %c0_i32_0 = arith.constant 0 : i32
    return %c0_i32, %arg1 : i32, i32
  }
  func.func @transform_3(%arg0: i32, %arg1: i32, %arg2: i32) -> (i32, i32) {
    %c0_i32 = arith.constant 0 : i32
    return %arg0, %arg1 : i32, i32
  }
}

module attributes {stable_mosaic.version = 11 : i64} {
  func.func @_max9_kernel(%arg0: i32, %arg1: memref<64x128xbf16, #tpu.memory_space<vmem>>, %arg2: memref<64x128xbf16, #tpu.memory_space<vmem>>, %arg3: memref<64x128xbf16, #tpu.memory_space<vmem>>, %arg4: memref<64x128xbf16, #tpu.memory_space<vmem>>, %arg5: memref<64x128xbf16, #tpu.memory_space<vmem>>, %arg6: memref<64x128xbf16, #tpu.memory_space<vmem>>, %arg7: memref<64x128xbf16, #tpu.memory_space<vmem>>, %arg8: memref<64x128xbf16, #tpu.memory_space<vmem>>, %arg9: memref<64x128xbf16, #tpu.memory_space<vmem>>, %arg10: memref<64x128xbf16, #tpu.memory_space<vmem>>) attributes {dimension_semantics = [#tpu.dimension_semantics<parallel>], iteration_bounds = array<i64: 1>, scalar_prefetch = 0 : i64, scratch_operands = 0 : i64, tpu.core_type = #tpu.core_type<tc>, window_params = [{transform_indices = @transform_0, window_bounds = array<i64: 64, 128>}, {transform_indices = @transform_1, window_bounds = array<i64: 64, 128>}, {transform_indices = @transform_2, window_bounds = array<i64: 64, 128>}, {transform_indices = @transform_3, window_bounds = array<i64: 64, 128>}, {transform_indices = @transform_4, window_bounds = array<i64: 64, 128>}, {transform_indices = @transform_5, window_bounds = array<i64: 64, 128>}, {transform_indices = @transform_6, window_bounds = array<i64: 64, 128>}, {transform_indices = @transform_7, window_bounds = array<i64: 64, 128>}, {transform_indices = @transform_8, window_bounds = array<i64: 64, 128>}, {transform_indices = @transform_9, window_bounds = array<i64: 64, 128>}]} {
    %c0 = arith.constant 0 : index
    %c0_0 = arith.constant 0 : index
    %0 = vector.load %arg1[%c0, %c0_0] : memref<64x128xbf16, #tpu.memory_space<vmem>>, vector<64x128xbf16>
    %c0_1 = arith.constant 0 : index
    %c0_2 = arith.constant 0 : index
    %1 = vector.load %arg2[%c0_1, %c0_2] : memref<64x128xbf16, #tpu.memory_space<vmem>>, vector<64x128xbf16>
    %2 = arith.maximumf %0, %1 : vector<64x128xbf16>
    %c0_3 = arith.constant 0 : index
    %c0_4 = arith.constant 0 : index
    %3 = vector.load %arg3[%c0_3, %c0_4] : memref<64x128xbf16, #tpu.memory_space<vmem>>, vector<64x128xbf16>
    %4 = arith.maximumf %2, %3 : vector<64x128xbf16>
    %c0_5 = arith.constant 0 : index
    %c0_6 = arith.constant 0 : index
    %5 = vector.load %arg4[%c0_5, %c0_6] : memref<64x128xbf16, #tpu.memory_space<vmem>>, vector<64x128xbf16>
    %6 = arith.maximumf %4, %5 : vector<64x128xbf16>
    %c0_7 = arith.constant 0 : index
    %c0_8 = arith.constant 0 : index
    %7 = vector.load %arg5[%c0_7, %c0_8] : memref<64x128xbf16, #tpu.memory_space<vmem>>, vector<64x128xbf16>
    %8 = arith.maximumf %6, %7 : vector<64x128xbf16>
    %c0_9 = arith.constant 0 : index
    %c0_10 = arith.constant 0 : index
    %9 = vector.load %arg6[%c0_9, %c0_10] : memref<64x128xbf16, #tpu.memory_space<vmem>>, vector<64x128xbf16>
    %10 = arith.maximumf %8, %9 : vector<64x128xbf16>
    %c0_11 = arith.constant 0 : index
    %c0_12 = arith.constant 0 : index
    %11 = vector.load %arg7[%c0_11, %c0_12] : memref<64x128xbf16, #tpu.memory_space<vmem>>, vector<64x128xbf16>
    %12 = arith.maximumf %10, %11 : vector<64x128xbf16>
    %c0_13 = arith.constant 0 : index
    %c0_14 = arith.constant 0 : index
    %13 = vector.load %arg8[%c0_13, %c0_14] : memref<64x128xbf16, #tpu.memory_space<vmem>>, vector<64x128xbf16>
    %14 = arith.maximumf %12, %13 : vector<64x128xbf16>
    %c0_15 = arith.constant 0 : index
    %c0_16 = arith.constant 0 : index
    %15 = vector.load %arg9[%c0_15, %c0_16] : memref<64x128xbf16, #tpu.memory_space<vmem>>, vector<64x128xbf16>
    %16 = arith.maximumf %14, %15 : vector<64x128xbf16>
    %c0_17 = arith.constant 0 : index
    %c0_18 = arith.constant 0 : index
    %17 = vector.load %arg10[%c0_17, %c0_18] : memref<64x128xbf16, #tpu.memory_space<vmem>>, vector<64x128xbf16>
    tpu.vector_store %arg10[%c0_17, %c0_18], %16 {strides = array<i32>} : memref<64x128xbf16, #tpu.memory_space<vmem>>, vector<64x128xbf16>,
    return
  }
  func.func @transform_0(%arg0: i32) -> (i32, i32) {
    %c0_i32 = arith.constant 0 : i32
    %c0_i32_0 = arith.constant 0 : i32
    return %arg0, %c0_i32 : i32, i32
  }
  func.func @transform_1(%arg0: i32) -> (i32, i32) {
    %c0_i32 = arith.constant 0 : i32
    %c0_i32_0 = arith.constant 0 : i32
    return %arg0, %c0_i32 : i32, i32
  }
  func.func @transform_2(%arg0: i32) -> (i32, i32) {
    %c0_i32 = arith.constant 0 : i32
    %c0_i32_0 = arith.constant 0 : i32
    return %arg0, %c0_i32 : i32, i32
  }
  func.func @transform_3(%arg0: i32) -> (i32, i32) {
    %c0_i32 = arith.constant 0 : i32
    %c0_i32_0 = arith.constant 0 : i32
    return %arg0, %c0_i32 : i32, i32
  }
  func.func @transform_4(%arg0: i32) -> (i32, i32) {
    %c0_i32 = arith.constant 0 : i32
    %c0_i32_0 = arith.constant 0 : i32
    return %arg0, %c0_i32 : i32, i32
  }
  func.func @transform_5(%arg0: i32) -> (i32, i32) {
    %c0_i32 = arith.constant 0 : i32
    %c0_i32_0 = arith.constant 0 : i32
    return %arg0, %c0_i32 : i32, i32
  }
  func.func @transform_6(%arg0: i32) -> (i32, i32) {
    %c0_i32 = arith.constant 0 : i32
    %c0_i32_0 = arith.constant 0 : i32
    return %arg0, %c0_i32 : i32, i32
  }
  func.func @transform_7(%arg0: i32) -> (i32, i32) {
    %c0_i32 = arith.constant 0 : i32
    %c0_i32_0 = arith.constant 0 : i32
    return %arg0, %c0_i32 : i32, i32
  }
  func.func @transform_8(%arg0: i32) -> (i32, i32) {
    %c0_i32 = arith.constant 0 : i32
    %c0_i32_0 = arith.constant 0 : i32
    return %arg0, %c0_i32 : i32, i32
  }
  func.func @transform_9(%arg0: i32) -> (i32, i32) {
    %c0_i32 = arith.constant 0 : i32
    %c0_i32_0 = arith.constant 0 : i32
    return %arg0, %c0_i32 : i32, i32
  }
}

</mosaic_0001>

<llo_original>
// kernel: _stem_stage.3
$region0: #{_stem_stage.3}
  #allocation0 [shape = 'u32[]', space=smem, size = 0x4, offset = 0x4, fixed_abs, tag = 'smem constant byte address 0x4 - core index']
  #allocation1 [shape = 'u32[144,128]{1,0:T(1,128)}', space=vmem, size = 0x12000, scoped, tag = 'internal scratch']
  %s0 = inlined_call_operand.vmem [shape: bf16[64,128], index: 0, kind: input, shape index: {}]
  %s1 = inlined_call_operand.vmem [shape: bf16[64,128], index: 1, kind: input, shape index: {}]
  %s2 = inlined_call_operand.vmem [shape: bf16[64,128], index: 2, kind: input, shape index: {}]
  %s3 = inlined_call_operand.vmem [shape: bf16[64,128], index: 3, kind: input, shape index: {}]
  %s4 = inlined_call_operand.vmem [shape: bf16[64,128], index: 4, kind: input, shape index: {}]
  %s5 = inlined_call_operand.vmem [shape: bf16[64,128], index: 5, kind: input, shape index: {}]
  %s6 = inlined_call_operand.vmem [shape: bf16[64,128], index: 6, kind: input, shape index: {}]
  %s7 = inlined_call_operand.vmem [shape: bf16[64,128], index: 7, kind: input, shape index: {}]
  %s8 = inlined_call_operand.vmem [shape: bf16[64,128], index: 8, kind: input, shape index: {}]
  %s9 = inlined_call_operand.vmem [shape: bf16[64,128], index: 9, kind: output, shape index: {}]
  %s10 = sld [smem:[#allocation0]]
  $region46: #{_stem_stage.3} parent=0
    _
  %s12 = ssub.s32 1, %s10
  %s13 = scalar_select 0, %s12, %s10
  // Predicated region
  $region2: #{_stem_stage.3} parent=0 // pred_check
    _
  $region3: #{_stem_stage.3} parent=0 // pred_check_branch
    %15 = sbr.rel (0) target = $region5
  $region4: #{_stem_stage.3} parent=0 // pred_region
    _
  $region5: #{_stem_stage.3} parent=0 // pred_fallthru
    _
  // Predicated region
  $region6: #{_stem_stage.3} parent=0 // pred_check
    _
  $region7: #{_stem_stage.3} parent=0 // pred_check_branch
    %17 = sbr.rel (0) target = $region9
  $region8: #{_stem_stage.3} parent=0 // pred_region
    _
  $region9: #{_stem_stage.3} parent=0 // pred_fallthru
    _
  // Predicated region
  $region10: #{_stem_stage.3} parent=0 // pred_check
    _
  $region11: #{_stem_stage.3} parent=0 // pred_check_branch
    %19 = sbr.rel (0) target = $region13
  $region12: #{_stem_stage.3} parent=0 // pred_region
    _
  $region13: #{_stem_stage.3} parent=0 // pred_fallthru
    _
  // Predicated region
  $region14: #{_stem_stage.3} parent=0 // pred_check
    _
  $region15: #{_stem_stage.3} parent=0 // pred_check_branch
    %21 = sbr.rel (0) target = $region17
  $region16: #{_stem_stage.3} parent=0 // pred_region
    _
  $region17: #{_stem_stage.3} parent=0 // pred_fallthru
    _
  // Predicated region
  $region18: #{_stem_stage.3} parent=0 // pred_check
    _
  $region19: #{_stem_stage.3} parent=0 // pred_check_branch
    %23 = sbr.rel (0) target = $region21
  $region20: #{_stem_stage.3} parent=0 // pred_region
    _
  $region21: #{_stem_stage.3} parent=0 // pred_fallthru
    _
  // Predicated region
  $region22: #{_stem_stage.3} parent=0 // pred_check
    _
  $region23: #{_stem_stage.3} parent=0 // pred_check_branch
    %25 = sbr.rel (0) target = $region25
  $region24: #{_stem_stage.3} parent=0 // pred_region
    _
  $region25: #{_stem_stage.3} parent=0 // pred_fallthru
    _
  // Predicated region
  $region26: #{_stem_stage.3} parent=0 // pred_check
    _
  $region27: #{_stem_stage.3} parent=0 // pred_check_branch
    %27 = sbr.rel (0) target = $region29
  $region28: #{_stem_stage.3} parent=0 // pred_region
    _
  $region29: #{_stem_stage.3} parent=0 // pred_fallthru
    _
  // Predicated region
  $region30: #{_stem_stage.3} parent=0 // pred_check
    _
  $region31: #{_stem_stage.3} parent=0 // pred_check_branch
    %29 = sbr.rel (0) target = $region33
  $region32: #{_stem_stage.3} parent=0 // pred_region
    _
  $region33: #{_stem_stage.3} parent=0 // pred_fallthru
    _
  // Predicated region
  $region34: #{_stem_stage.3} parent=0 // pred_check
    _
  $region35: #{_stem_stage.3} parent=0 // pred_check_branch
    %31 = sbr.rel (0) target = $region37
  $region36: #{_stem_stage.3} parent=0 // pred_region
    _
  $region37: #{_stem_stage.3} parent=0 // pred_fallthru
    _
  %v32 = vld [vmem:[%s0] sm:$0xf]
  %v33 = vld [vmem:[%s0 + $0x4] sm:$0xf]
  %v34 = vld [vmem:[%s0 + $0x8] sm:$0xf]
  %v35 = vld [vmem:[%s0 + $0xc] sm:$0xf]
  %v36 = vld [vmem:[%s0 + $0x10] sm:$0xf]
  %v37 = vld [vmem:[%s0 + $0x14] sm:$0xf]
  %v38 = vld [vmem:[%s0 + $0x18] sm:$0xf]
  %v39 = vld [vmem:[%s0 + $0x1c] sm:$0xf]
  %v40 = vld [vmem:[%s1] sm:$0xf]
  %v41 = vld [vmem:[%s1 + $0x4] sm:$0xf]
  %v42 = vld [vmem:[%s1 + $0x8] sm:$0xf]
  %v43 = vld [vmem:[%s1 + $0xc] sm:$0xf]
  %v44 = vld [vmem:[%s1 + $0x10] sm:$0xf]
  %v45 = vld [vmem:[%s1 + $0x14] sm:$0xf]
  %v46 = vld [vmem:[%s1 + $0x18] sm:$0xf]
  %v47 = vld [vmem:[%s1 + $0x1c] sm:$0xf]
  %v48 = vmax.bf16 %v32, %v40
  %v49 = vmax.bf16 %v33, %v41
  %v50 = vmax.bf16 %v34, %v42
  %v51 = vmax.bf16 %v35, %v43
  %v52 = vmax.bf16 %v36, %v44
  %v53 = vmax.bf16 %v37, %v45
  %v54 = vmax.bf16 %v38, %v46
  %v55 = vmax.bf16 %v39, %v47
  %v56 = vld [vmem:[%s2] sm:$0xf]
  %v57 = vld [vmem:[%s2 + $0x4] sm:$0xf]
  %v58 = vld [vmem:[%s2 + $0x8] sm:$0xf]
  %v59 = vld [vmem:[%s2 + $0xc] sm:$0xf]
  %v60 = vld [vmem:[%s2 + $0x10] sm:$0xf]
  %v61 = vld [vmem:[%s2 + $0x14] sm:$0xf]
  %v62 = vld [vmem:[%s2 + $0x18] sm:$0xf]
  %v63 = vld [vmem:[%s2 + $0x1c] sm:$0xf]
  %v64 = vmax.bf16 %v48, %v56
  %v65 = vmax.bf16 %v49, %v57
  %v66 = vmax.bf16 %v50, %v58
  %v67 = vmax.bf16 %v51, %v59
  %v68 = vmax.bf16 %v52, %v60
  %v69 = vmax.bf16 %v53, %v61
  %v70 = vmax.bf16 %v54, %v62
  %v71 = vmax.bf16 %v55, %v63
  %v72 = vld [vmem:[%s3] sm:$0xf]
  %v73 = vld [vmem:[%s3 + $0x4] sm:$0xf]
  %v74 = vld [vmem:[%s3 + $0x8] sm:$0xf]
  %v75 = vld [vmem:[%s3 + $0xc] sm:$0xf]
  %v76 = vld [vmem:[%s3 + $0x10] sm:$0xf]
  %v77 = vld [vmem:[%s3 + $0x14] sm:$0xf]
  %v78 = vld [vmem:[%s3 + $0x18] sm:$0xf]
  %v79 = vld [vmem:[%s3 + $0x1c] sm:$0xf]
  %v80 = vmax.bf16 %v64, %v72
  %v81 = vmax.bf16 %v65, %v73
  %v82 = vmax.bf16 %v66, %v74
  %v83 = vmax.bf16 %v67, %v75
  %v84 = vmax.bf16 %v68, %v76
  %v85 = vmax.bf16 %v69, %v77
  %v86 = vmax.bf16 %v70, %v78
  %v87 = vmax.bf16 %v71, %v79
  %v88 = vld [vmem:[%s4] sm:$0xf]
  %v89 = vld [vmem:[%s4 + $0x4] sm:$0xf]
  %v90 = vld [vmem:[%s4 + $0x8] sm:$0xf]
  %v91 = vld [vmem:[%s4 + $0xc] sm:$0xf]
  %v92 = vld [vmem:[%s4 + $0x10] sm:$0xf]
  %v93 = vld [vmem:[%s4 + $0x14] sm:$0xf]
  %v94 = vld [vmem:[%s4 + $0x18] sm:$0xf]
  %v95 = vld [vmem:[%s4 + $0x1c] sm:$0xf]
  %v96 = vmax.bf16 %v80, %v88
  %v97 = vmax.bf16 %v81, %v89
  %v98 = vmax.bf16 %v82, %v90
  %v99 = vmax.bf16 %v83, %v91
  %v100 = vmax.bf16 %v84, %v92
  %v101 = vmax.bf16 %v85, %v93
  %v102 = vmax.bf16 %v86, %v94
  %v103 = vmax.bf16 %v87, %v95
  %v104 = vld [vmem:[%s5] sm:$0xf]
  %v105 = vld [vmem:[%s5 + $0x4] sm:$0xf]
  %v106 = vld [vmem:[%s5 + $0x8] sm:$0xf]
  %v107 = vld [vmem:[%s5 + $0xc] sm:$0xf]
  %v108 = vld [vmem:[%s5 + $0x10] sm:$0xf]
  %v109 = vld [vmem:[%s5 + $0x14] sm:$0xf]
  %v110 = vld [vmem:[%s5 + $0x18] sm:$0xf]
  %v111 = vld [vmem:[%s5 + $0x1c] sm:$0xf]
  %v112 = vmax.bf16 %v96, %v104
  %v113 = vmax.bf16 %v97, %v105
  %v114 = vmax.bf16 %v98, %v106
  %v115 = vmax.bf16 %v99, %v107
  %v116 = vmax.bf16 %v100, %v108
  %v117 = vmax.bf16 %v101, %v109
  %v118 = vmax.bf16 %v102, %v110
  %v119 = vmax.bf16 %v103, %v111
  %v120 = vld [vmem:[%s6] sm:$0xf]
  %v121 = vld [vmem:[%s6 + $0x4] sm:$0xf]
  %v122 = vld [vmem:[%s6 + $0x8] sm:$0xf]
  %v123 = vld [vmem:[%s6 + $0xc] sm:$0xf]
  %v124 = vld [vmem:[%s6 + $0x10] sm:$0xf]
  %v125 = vld [vmem:[%s6 + $0x14] sm:$0xf]
  %v126 = vld [vmem:[%s6 + $0x18] sm:$0xf]
  %v127 = vld [vmem:[%s6 + $0x1c] sm:$0xf]
  %v128 = vmax.bf16 %v112, %v120
  %v129 = vmax.bf16 %v113, %v121
  %v130 = vmax.bf16 %v114, %v122
  %v131 = vmax.bf16 %v115, %v123
  %v132 = vmax.bf16 %v116, %v124
  %v133 = vmax.bf16 %v117, %v125
  %v134 = vmax.bf16 %v118, %v126
  %v135 = vmax.bf16 %v119, %v127
  %v136 = vld [vmem:[%s7] sm:$0xf]
  %v137 = vld [vmem:[%s7 + $0x4] sm:$0xf]
  %v138 = vld [vmem:[%s7 + $0x8] sm:$0xf]
  %v139 = vld [vmem:[%s7 + $0xc] sm:$0xf]
  %v140 = vld [vmem:[%s7 + $0x10] sm:$0xf]
  %v141 = vld [vmem:[%s7 + $0x14] sm:$0xf]
  %v142 = vld [vmem:[%s7 + $0x18] sm:$0xf]
  %v143 = vld [vmem:[%s7 + $0x1c] sm:$0xf]
  %v144 = vmax.bf16 %v128, %v136
  %v145 = vmax.bf16 %v129, %v137
  %v146 = vmax.bf16 %v130, %v138
  %v147 = vmax.bf16 %v131, %v139
  %v148 = vmax.bf16 %v132, %v140
  %v149 = vmax.bf16 %v133, %v141
  %v150 = vmax.bf16 %v134, %v142
  %v151 = vmax.bf16 %v135, %v143
  %v152 = vld [vmem:[%s8] sm:$0xf]
  %v153 = vld [vmem:[%s8 + $0x4] sm:$0xf]
  %v154 = vld [vmem:[%s8 + $0x8] sm:$0xf]
  %v155 = vld [vmem:[%s8 + $0xc] sm:$0xf]
  %v156 = vld [vmem:[%s8 + $0x10] sm:$0xf]
  %v157 = vld [vmem:[%s8 + $0x14] sm:$0xf]
  %v158 = vld [vmem:[%s8 + $0x18] sm:$0xf]
  %v159 = vld [vmem:[%s8 + $0x1c] sm:$0xf]
  %v160 = vmax.bf16 %v144, %v152
  %v161 = vmax.bf16 %v145, %v153
  %v162 = vmax.bf16 %v146, %v154
  %v163 = vmax.bf16 %v147, %v155
  %v164 = vmax.bf16 %v148, %v156
  %v165 = vmax.bf16 %v149, %v157
  %v166 = vmax.bf16 %v150, %v158
  %v167 = vmax.bf16 %v151, %v159
  %168 = vst [vmem:[%s9] sm:$0xf] %v160
  %169 = vst [vmem:[%s9 + $0x4] sm:$0xf] %v161
  %170 = vst [vmem:[%s9 + $0x8] sm:$0xf] %v162
  %171 = vst [vmem:[%s9 + $0xc] sm:$0xf] %v163
  %172 = vst [vmem:[%s9 + $0x10] sm:$0xf] %v164
  %173 = vst [vmem:[%s9 + $0x14] sm:$0xf] %v165
  %174 = vst [vmem:[%s9 + $0x18] sm:$0xf] %v166
  %175 = vst [vmem:[%s9 + $0x1c] sm:$0xf] %v167
  // Predicated region
  $region38: #{_stem_stage.3} parent=0 // pred_check
    _
  $region39: #{_stem_stage.3} parent=0 // pred_check_branch
    %177 = sbr.rel (0) target = $region41
  $region40: #{_stem_stage.3} parent=0 // pred_region
    _
  $region41: #{_stem_stage.3} parent=0 // pred_fallthru
    _
  // Predicated region
  $region42: #{_stem_stage.3} parent=0 // pred_check
    _
  $region43: #{_stem_stage.3} parent=0 // pred_check_branch
    %179 = sbr.rel (0) target = $region45
  $region44: #{_stem_stage.3} parent=0 // pred_region
    _
  $region45: #{_stem_stage.3} parent=0 // pred_fallthru
    _

// kernel: _stem_stage.2
$region0: #{_stem_stage.2}
  #allocation0 [shape = 'u32[]', space=smem, size = 0x4, offset = 0x4, fixed_abs, tag = 'smem constant byte address 0x4 - core index']
  #allocation1 [shape = 'u32[144,128]{1,0:T(1,128)}', space=vmem, size = 0x12000, scoped, tag = 'internal scratch']
  #allocation2 [shape = 'f32[512,64]{1,0:T(8,128)}', space=vmem, size = 0x40000, scoped, tag = 'scratch operand']
  %s0 = inlined_call_operand.vmem [shape: bf16[512,147], index: 0, kind: input, shape index: {}]
  %s1 = inlined_call_operand.vmem [shape: bf16[147,64], index: 1, kind: input, shape index: {}]
  %s2 = inlined_call_operand.vmem [shape: f32[1,64], index: 2, kind: input, shape index: {}]
  %s3 = inlined_call_operand.vmem [shape: bf16[512,64], index: 3, kind: output, shape index: {}]
  %s4 = sld [smem:[#allocation0]]
  $region30: #{_stem_stage.2} parent=0
    _
  %s6 = ssub.s32 1, %s4
  %s7 = scalar_select 0, %s6, %s4
  // Predicated region
  $region2: #{_stem_stage.2} parent=0 // pred_check
    _
  $region3: #{_stem_stage.2} parent=0 // pred_check_branch
    %9 = sbr.rel (0) target = $region5
  $region4: #{_stem_stage.2} parent=0 // pred_region
    _
  $region5: #{_stem_stage.2} parent=0 // pred_fallthru
    _
  // Predicated region
  $region6: #{_stem_stage.2} parent=0 // pred_check
    _
  $region7: #{_stem_stage.2} parent=0 // pred_check_branch
    %11 = sbr.rel (0) target = $region9
  $region8: #{_stem_stage.2} parent=0 // pred_region
    _
  $region9: #{_stem_stage.2} parent=0 // pred_fallthru
    _
  // Predicated region
  $region10: #{_stem_stage.2} parent=0 // pred_check
    _
  $region11: #{_stem_stage.2} parent=0 // pred_check_branch
    %13 = sbr.rel (0) target = $region13
  $region12: #{_stem_stage.2} parent=0 // pred_region
    _
  $region13: #{_stem_stage.2} parent=0 // pred_fallthru
    _
  %p15 = scmp.eq.s32.totalorder 0, 0
  // Predicated region
  $region14: #{_stem_stage.2} parent=0 // pred_check
    %p16 = pneg %p15
  $region15: #{_stem_stage.2} parent=0 // pred_check_branch
    %18 = sbr.rel (%p16) target = $region17
  $region16: #{_stem_stage.2} parent=0 // pred_region
    %vm19 = vcmask 523264
    %20 = vst.msk [vmem:[#allocation2] sm:$0xff] %vm19, 0.0
    %21 = vst.msk [vmem:[#allocation2 + $0x8] sm:$0xff] %vm19, 0.0
    %22 = vst.msk [vmem:[#allocation2 + $0x10] sm:$0xff] %vm19, 0.0
    %23 = vst.msk [vmem:[#allocation2 + $0x18] sm:$0xff] %vm19, 0.0
    %24 = vst.msk [vmem:[#allocation2 + $0x20] sm:$0xff] %vm19, 0.0
    %25 = vst.msk [vmem:[#allocation2 + $0x28] sm:$0xff] %vm19, 0.0
    %26 = vst.msk [vmem:[#allocation2 + $0x30] sm:$0xff] %vm19, 0.0
    %27 = vst.msk [vmem:[#allocation2 + $0x38] sm:$0xff] %vm19, 0.0
    %28 = vst.msk [vmem:[#allocation2 + $0x40] sm:$0xff] %vm19, 0.0
    %29 = vst.msk [vmem:[#allocation2 + $0x48] sm:$0xff] %vm19, 0.0
    %30 = vst.msk [vmem:[#allocation2 + $0x50] sm:$0xff] %vm19, 0.0
    %31 = vst.msk [vmem:[#allocation2 + $0x58] sm:$0xff] %vm19, 0.0
    %32 = vst.msk [vmem:[#allocation2 + $0x60] sm:$0xff] %vm19, 0.0
    %33 = vst.msk [vmem:[#allocation2 + $0x68] sm:$0xff] %vm19, 0.0
    %34 = vst.msk [vmem:[#allocation2 + $0x70] sm:$0xff] %vm19, 0.0
    %35 = vst.msk [vmem:[#allocation2 + $0x78] sm:$0xff] %vm19, 0.0
    %36 = vst.msk [vmem:[#allocation2 + $0x80] sm:$0xff] %vm19, 0.0
    %37 = vst.msk [vmem:[#allocation2 + $0x88] sm:$0xff] %vm19, 0.0
    %38 = vst.msk [vmem:[#allocation2 + $0x90] sm:$0xff] %vm19, 0.0
    %39 = vst.msk [vmem:[#allocation2 + $0x98] sm:$0xff] %vm19, 0.0
    %40 = vst.msk [vmem:[#allocation2 + $0xa0] sm:$0xff] %vm19, 0.0
    %41 = vst.msk [vmem:[#allocation2 + $0xa8] sm:$0xff] %vm19, 0.0
    %42 = vst.msk [vmem:[#allocation2 + $0xb0] sm:$0xff] %vm19, 0.0
    %43 = vst.msk [vmem:[#allocation2 + $0xb8] sm:$0xff] %vm19, 0.0
    %44 = vst.msk [vmem:[#allocation2 + $0xc0] sm:$0xff] %vm19, 0.0
    %45 = vst.msk [vmem:[#allocation2 + $0xc8] sm:$0xff] %vm19, 0.0
    %46 = vst.msk [vmem:[#allocation2 + $0xd0] sm:$0xff] %vm19, 0.0
    %47 = vst.msk [vmem:[#allocation2 + $0xd8] sm:$0xff] %vm19, 0.0
    %48 = vst.msk [vmem:[#allocation2 + $0xe0] sm:$0xff] %vm19, 0.0
    %49 = vst.msk [vmem:[#allocation2 + $0xe8] sm:$0xff] %vm19, 0.0
    %50 = vst.msk [vmem:[#allocation2 + $0xf0] sm:$0xff] %vm19, 0.0
    %51 = vst.msk [vmem:[#allocation2 + $0xf8] sm:$0xff] %vm19, 0.0
    %52 = vst.msk [vmem:[#allocation2 + $0x100] sm:$0xff] %vm19, 0.0
    %53 = vst.msk [vmem:[#allocation2 + $0x108] sm:$0xff] %vm19, 0.0
    %54 = vst.msk [vmem:[#allocation2 + $0x110] sm:$0xff] %vm19, 0.0
    %55 = vst.msk [vmem:[#allocation2 + $0x118] sm:$0xff] %vm19, 0.0
    %56 = vst.msk [vmem:[#allocation2 + $0x120] sm:$0xff] %vm19, 0.0
    %57 = vst.msk [vmem:[#allocation2 + $0x128] sm:$0xff] %vm19, 0.0
    %58 = vst.msk [vmem:[#allocation2 + $0x130] sm:$0xff] %vm19, 0.0
    %59 = vst.msk [vmem:[#allocation2 + $0x138] sm:$0xff] %vm19, 0.0
    %60 = vst.msk [vmem:[#allocation2 + $0x140] sm:$0xff] %vm19, 0.0
    %61 = vst.msk [vmem:[#allocation2 + $0x148] sm:$0xff] %vm19, 0.0
    %62 = vst.msk [vmem:[#allocation2 + $0x150] sm:$0xff] %vm19, 0.0
    %63 = vst.msk [vmem:[#allocation2 + $0x158] sm:$0xff] %vm19, 0.0
    %64 = vst.msk [vmem:[#allocation2 + $0x160] sm:$0xff] %vm19, 0.0
    %65 = vst.msk [vmem:[#allocation2 + $0x168] sm:$0xff] %vm19, 0.0
    %66 = vst.msk [vmem:[#allocation2 + $0x170] sm:$0xff] %vm19, 0.0
    %67 = vst.msk [vmem:[#allocation2 + $0x178] sm:$0xff] %vm19, 0.0
    %68 = vst.msk [vmem:[#allocation2 + $0x180] sm:$0xff] %vm19, 0.0
    %69 = vst.msk [vmem:[#allocation2 + $0x188] sm:$0xff] %vm19, 0.0
    %70 = vst.msk [vmem:[#allocation2 + $0x190] sm:$0xff] %vm19, 0.0
    %71 = vst.msk [vmem:[#allocation2 + $0x198] sm:$0xff] %vm19, 0.0
    %72 = vst.msk [vmem:[#allocation2 + $0x1a0] sm:$0xff] %vm19, 0.0
    %73 = vst.msk [vmem:[#allocation2 + $0x1a8] sm:$0xff] %vm19, 0.0
    %74 = vst.msk [vmem:[#allocation2 + $0x1b0] sm:$0xff] %vm19, 0.0
    %75 = vst.msk [vmem:[#allocation2 + $0x1b8] sm:$0xff] %vm19, 0.0
    %76 = vst.msk [vmem:[#allocation2 + $0x1c0] sm:$0xff] %vm19, 0.0
    %77 = vst.msk [vmem:[#allocation2 + $0x1c8] sm:$0xff] %vm19, 0.0
    %78 = vst.msk [vmem:[#allocation2 + $0x1d0] sm:$0xff] %vm19, 0.0
    %79 = vst.msk [vmem:[#allocation2 + $0x1d8] sm:$0xff] %vm19, 0.0
    %80 = vst.msk [vmem:[#allocation2 + $0x1e0] sm:$0xff] %vm19, 0.0
    %81 = vst.msk [vmem:[#allocation2 + $0x1e8] sm:$0xff] %vm19, 0.0
    %82 = vst.msk [vmem:[#allocation2 + $0x1f0] sm:$0xff] %vm19, 0.0
    %83 = vst.msk [vmem:[#allocation2 + $0x1f8] sm:$0xff] %vm19, 0.0
  $region17: #{_stem_stage.2} parent=0 // pred_fallthru
    _
  %v84 = vld [vmem:[#allocation2] sm:$0xff]
  %v85 = vld [vmem:[#allocation2 + $0x8] sm:$0xff]
  %v86 = vld [vmem:[#allocation2 + $0x10] sm:$0xff]
  %v87 = vld [vmem:[#allocation2 + $0x18] sm:$0xff]
  %v88 = vld [vmem:[#allocation2 + $0x20] sm:$0xff]
  %v89 = vld [vmem:[#allocation2 + $0x28] sm:$0xff]
  %v90 = vld [vmem:[#allocation2 + $0x30] sm:$0xff]
  %v91 = vld [vmem:[#allocation2 + $0x38] sm:$0xff]
  %v92 = vld [vmem:[#allocation2 + $0x40] sm:$0xff]
  %v93 = vld [vmem:[#allocation2 + $0x48] sm:$0xff]
  %v94 = vld [vmem:[#allocation2 + $0x50] sm:$0xff]
  %v95 = vld [vmem:[#allocation2 + $0x58] sm:$0xff]
  %v96 = vld [vmem:[#allocation2 + $0x60] sm:$0xff]
  %v97 = vld [vmem:[#allocation2 + $0x68] sm:$0xff]
  %v98 = vld [vmem:[#allocation2 + $0x70] sm:$0xff]
  %v99 = vld [vmem:[#allocation2 + $0x78] sm:$0xff]
  %v100 = vld [vmem:[#allocation2 + $0x80] sm:$0xff]
  %v101 = vld [vmem:[#allocation2 + $0x88] sm:$0xff]
  %v102 = vld [vmem:[#allocation2 + $0x90] sm:$0xff]
  %v103 = vld [vmem:[#allocation2 + $0x98] sm:$0xff]
  %v104 = vld [vmem:[#allocation2 + $0xa0] sm:$0xff]
  %v105 = vld [vmem:[#allocation2 + $0xa8] sm:$0xff]
  %v106 = vld [vmem:[#allocation2 + $0xb0] sm:$0xff]
  %v107 = vld [vmem:[#allocation2 + $0xb8] sm:$0xff]
  %v108 = vld [vmem:[#allocation2 + $0xc0] sm:$0xff]
  %v109 = vld [vmem:[#allocation2 + $0xc8] sm:$0xff]
  %v110 = vld [vmem:[#allocation2 + $0xd0] sm:$0xff]
  %v111 = vld [vmem:[#allocation2 + $0xd8] sm:$0xff]
  %v112 = vld [vmem:[#allocation2 + $0xe0] sm:$0xff]
  %v113 = vld [vmem:[#allocation2 + $0xe8] sm:$0xff]
  %v114 = vld [vmem:[#allocation2 + $0xf0] sm:$0xff]
  %v115 = vld [vmem:[#allocation2 + $0xf8] sm:$0xff]
  %v116 = vld [vmem:[#allocation2 + $0x100] sm:$0xff]
  %v117 = vld [vmem:[#allocation2 + $0x108] sm:$0xff]
  %v118 = vld [vmem:[#allocation2 + $0x110] sm:$0xff]
  %v119 = vld [vmem:[#allocation2 + $0x118] sm:$0xff]
  %v120 = vld [vmem:[#allocation2 + $0x120] sm:$0xff]
  %v121 = vld [vmem:[#allocation2 + $0x128] sm:$0xff]
  %v122 = vld [vmem:[#allocation2 + $0x130] sm:$0xff]
  %v123 = vld [vmem:[#allocation2 + $0x138] sm:$0xff]
  %v124 = vld [vmem:[#allocation2 + $0x140] sm:$0xff]
  %v125 = vld [vmem:[#allocation2 + $0x148] sm:$0xff]
  %v126 = vld [vmem:[#allocation2 + $0x150] sm:$0xff]
  %v127 = vld [vmem:[#allocation2 + $0x158] sm:$0xff]
  %v128 = vld [vmem:[#allocation2 + $0x160] sm:$0xff]
  %v129 = vld [vmem:[#allocation2 + $0x168] sm:$0xff]
  %v130 = vld [vmem:[#allocation2 + $0x170] sm:$0xff]
  %v131 = vld [vmem:[#allocation2 + $0x178] sm:$0xff]
  %v132 = vld [vmem:[#allocation2 + $0x180] sm:$0xff]
  %v133 = vld [vmem:[#allocation2 + $0x188] sm:$0xff]
  %v134 = vld [vmem:[#allocation2 + $0x190] sm:$0xff]
  %v135 = vld [vmem:[#allocation2 + $0x198] sm:$0xff]
  %v136 = vld [vmem:[#allocation2 + $0x1a0] sm:$0xff]
  %v137 = vld [vmem:[#allocation2 + $0x1a8] sm:$0xff]
  %v138 = vld [vmem:[#allocation2 + $0x1b0] sm:$0xff]
  %v139 = vld [vmem:[#allocation2 + $0x1b8] sm:$0xff]
  %v140 = vld [vmem:[#allocation2 + $0x1c0] sm:$0xff]
  %v141 = vld [vmem:[#allocation2 + $0x1c8] sm:$0xff]
  %v142 = vld [vmem:[#allocation2 + $0x1d0] sm:$0xff]
  %v143 = vld [vmem:[#allocation2 + $0x1d8] sm:$0xff]
  %v144 = vld [vmem:[#allocation2 + $0x1e0] sm:$0xff]
  %v145 = vld [vmem:[#allocation2 + $0x1e8] sm:$0xff]
  %v146 = vld [vmem:[#allocation2 + $0x1f0] sm:$0xff]
  %v147 = vld [vmem:[#allocation2 + $0x1f8] sm:$0xff]
  %v148 = vld [vmem:[%s0] sm:$0xff]
  %v149 = vld [vmem:[%s0 + $0x8] sm:$0xff]
  %v150 = vld [vmem:[%s0 + $0x10] sm:$0xff]
  %v151 = vld [vmem:[%s0 + $0x18] sm:$0xff]
  %v152 = vld [vmem:[%s0 + $0x20] sm:$0xff]
  %v153 = vld [vmem:[%s0 + $0x28] sm:$0xff]
  %v154 = vld [vmem:[%s0 + $0x30] sm:$0xff]
  %v155 = vld [vmem:[%s0 + $0x38] sm:$0xff]
  %v156 = vld [vmem:[%s0 + $0x40] sm:$0xff]
  %v157 = vld [vmem:[%s0 + $0x48] sm:$0xff]
  %v158 = vld [vmem:[%s0 + $0x50] sm:$0xff]
  %v159 = vld [vmem:[%s0 + $0x58] sm:$0xff]
  %v160 = vld [vmem:[%s0 + $0x60] sm:$0xff]
  %v161 = vld [vmem:[%s0 + $0x68] sm:$0xff]
  %v162 = vld [vmem:[%s0 + $0x70] sm:$0xff]
  %v163 = vld [vmem:[%s0 + $0x78] sm:$0xff]
  %v164 = vld [vmem:[%s0 + $0x80] sm:$0xff]
  %v165 = vld [vmem:[%s0 + $0x88] sm:$0xff]
  %v166 = vld [vmem:[%s0 + $0x90] sm:$0xff]
  %v167 = vld [vmem:[%s0 + $0x98] sm:$0xff]
  %v168 = vld [vmem:[%s0 + $0xa0] sm:$0xff]
  %v169 = vld [vmem:[%s0 + $0xa8] sm:$0xff]
  %v170 = vld [vmem:[%s0 + $0xb0] sm:$0xff]
  %v171 = vld [vmem:[%s0 + $0xb8] sm:$0xff]
  %v172 = vld [vmem:[%s0 + $0xc0] sm:$0xff]
  %v173 = vld [vmem:[%s0 + $0xc8] sm:$0xff]
  %v174 = vld [vmem:[%s0 + $0xd0] sm:$0xff]
  %v175 = vld [vmem:[%s0 + $0xd8] sm:$0xff]
  %v176 = vld [vmem:[%s0 + $0xe0] sm:$0xff]
  %v177 = vld [vmem:[%s0 + $0xe8] sm:$0xff]
  %v178 = vld [vmem:[%s0 + $0xf0] sm:$0xff]
  %v179 = vld [vmem:[%s0 + $0xf8] sm:$0xff]
  %v180 = vld [vmem:[%s0 + $0x100] sm:$0xff]
  %v181 = vld [vmem:[%s0 + $0x108] sm:$0xff]
  %v182 = vld [vmem:[%s0 + $0x110] sm:$0xff]
  %v183 = vld [vmem:[%s0 + $0x118] sm:$0xff]
  %v184 = vld [vmem:[%s0 + $0x120] sm:$0xff]
  %v185 = vld [vmem:[%s0 + $0x128] sm:$0xff]
  %v186 = vld [vmem:[%s0 + $0x130] sm:$0xff]
  %v187 = vld [vmem:[%s0 + $0x138] sm:$0xff]
  %v188 = vld [vmem:[%s0 + $0x140] sm:$0xff]
  %v189 = vld [vmem:[%s0 + $0x148] sm:$0xff]
  %v190 = vld [vmem:[%s0 + $0x150] sm:$0xff]
  %v191 = vld [vmem:[%s0 + $0x158] sm:$0xff]
  %v192 = vld [vmem:[%s0 + $0x160] sm:$0xff]
  %v193 = vld [vmem:[%s0 + $0x168] sm:$0xff]
  %v194 = vld [vmem:[%s0 + $0x170] sm:$0xff]
  %v195 = vld [vmem:[%s0 + $0x178] sm:$0xff]
  %v196 = vld [vmem:[%s0 + $0x180] sm:$0xff]
  %v197 = vld [vmem:[%s0 + $0x188] sm:$0xff]
  %v198 = vld [vmem:[%s0 + $0x190] sm:$0xff]
  %v199 = vld [vmem:[%s0 + $0x198] sm:$0xff]
  %v200 = vld [vmem:[%s0 + $0x1a0] sm:$0xff]
  %v201 = vld [vmem:[%s0 + $0x1a8] sm:$0xff]
  %v202 = vld [vmem:[%s0 + $0x1b0] sm:$0xff]
  %v203 = vld [vmem:[%s0 + $0x1b8] sm:$0xff]
  %v204 = vld [vmem:[%s0 + $0x1c0] sm:$0xff]
  %v205 = vld [vmem:[%s0 + $0x1c8] sm:$0xff]
  %v206 = vld [vmem:[%s0 + $0x1d0] sm:$0xff]
  %v207 = vld [vmem:[%s0 + $0x1d8] sm:$0xff]
  %v208 = vld [vmem:[%s0 + $0x1e0] sm:$0xff]
  %v209 = vld [vmem:[%s0 + $0x1e8] sm:$0xff]
  %v210 = vld [vmem:[%s0 + $0x1f0] sm:$0xff]
  %v211 = vld [vmem:[%s0 + $0x1f8] sm:$0xff]
  %v212 = vld [vmem:[%s1] sm:$0xf]
  %v213 = vld [vmem:[%s1 + $0x4] sm:$0xf]
  %v214 = vld [vmem:[%s1 + $0x8] sm:$0xf]
  %v215 = vld [vmem:[%s1 + $0xc] sm:$0xf]
  %v216 = vld [vmem:[%s1 + $0x10] sm:$0xf]
  %v217 = vld [vmem:[%s1 + $0x14] sm:$0xf]
  %v218 = vld [vmem:[%s1 + $0x18] sm:$0xf]
  %v219 = vld [vmem:[%s1 + $0x1c] sm:$0xf]
  %v220 = vld [vmem:[%s1 + $0x20] sm:$0xf]
  %v221 = vld [vmem:[%s1 + $0x24] sm:$0xf]
  %v222 = vld [vmem:[%s1 + $0x28] sm:$0xf]
  %v223 = vld [vmem:[%s1 + $0x2c] sm:$0xf]
  %v224 = vld [vmem:[%s1 + $0x30] sm:$0xf]
  %v225 = vld [vmem:[%s1 + $0x34] sm:$0xf]
  %v226 = vld [vmem:[%s1 + $0x38] sm:$0xf]
  %v227 = vld [vmem:[%s1 + $0x3c] sm:$0xf]
  %v228 = vld [vmem:[%s1 + $0x40] sm:$0xf]
  %v229 = vld [vmem:[%s1 + $0x44] sm:$0xf]
  %v230 = vld [vmem:[%s1 + $0x48] sm:$0x3]
  %v295 = vunpack.c.l.b16 %v148
  %v296 = vunpack.c.h.b16 %v148
  %v297 = vunpack.c.l.b16 %v149
  %v298 = vunpack.c.h.b16 %v149
  %v299 = vunpack.c.l.b16 %v150
  %v300 = vunpack.c.h.b16 %v150
  %v301 = vunpack.c.l.b16 %v151
  %v302 = vunpack.c.h.b16 %v151
  %v303 = vunpack.c.l.b16 %v152
  %v304 = vunpack.c.h.b16 %v152
  %v305 = vunpack.c.l.b16 %v153
  %v306 = vunpack.c.h.b16 %v153
  %v307 = vunpack.c.l.b16 %v154
  %v308 = vunpack.c.h.b16 %v154
  %v309 = vunpack.c.l.b16 %v155
  %v310 = vunpack.c.h.b16 %v155
  %v311 = vunpack.c.l.b16 %v156
  %v312 = vunpack.c.h.b16 %v156
  %v313 = vunpack.c.l.b16 %v157
  %v314 = vunpack.c.h.b16 %v157
  %v315 = vunpack.c.l.b16 %v158
  %v316 = vunpack.c.h.b16 %v158
  %v317 = vunpack.c.l.b16 %v159
  %v318 = vunpack.c.h.b16 %v159
  %v319 = vunpack.c.l.b16 %v160
  %v320 = vunpack.c.h.b16 %v160
  %v321 = vunpack.c.l.b16 %v161
  %v322 = vunpack.c.h.b16 %v161
  %v323 = vunpack.c.l.b16 %v162
  %v324 = vunpack.c.h.b16 %v162
  %v325 = vunpack.c.l.b16 %v163
  %v326 = vunpack.c.h.b16 %v163
  %v327 = vunpack.c.l.b16 %v164
  %v328 = vunpack.c.h.b16 %v164
  %v329 = vunpack.c.l.b16 %v165
  %v330 = vunpack.c.h.b16 %v165
  %v331 = vunpack.c.l.b16 %v166
  %v332 = vunpack.c.h.b16 %v166
  %v333 = vunpack.c.l.b16 %v167
  %v334 = vunpack.c.h.b16 %v167
  %v335 = vunpack.c.l.b16 %v168
  %v336 = vunpack.c.h.b16 %v168
  %v337 = vunpack.c.l.b16 %v169
  %v338 = vunpack.c.h.b16 %v169
  %v339 = vunpack.c.l.b16 %v170
  %v340 = vunpack.c.h.b16 %v170
  %v341 = vunpack.c.l.b16 %v171
  %v342 = vunpack.c.h.b16 %v171
  %v343 = vunpack.c.l.b16 %v172
  %v344 = vunpack.c.h.b16 %v172
  %v345 = vunpack.c.l.b16 %v173
  %v346 = vunpack.c.h.b16 %v173
  %v347 = vunpack.c.l.b16 %v174
  %v348 = vunpack.c.h.b16 %v174
  %v349 = vunpack.c.l.b16 %v175
  %v350 = vunpack.c.h.b16 %v175
  %v351 = vunpack.c.l.b16 %v176
  %v352 = vunpack.c.h.b16 %v176
  %v353 = vunpack.c.l.b16 %v177
  %v354 = vunpack.c.h.b16 %v177
  %v355 = vunpack.c.l.b16 %v178
  %v356 = vunpack.c.h.b16 %v178
  %v357 = vunpack.c.l.b16 %v179
  %v358 = vunpack.c.h.b16 %v179
  %v359 = vunpack.c.l.b16 %v180
  %v360 = vunpack.c.h.b16 %v180
  %v361 = vunpack.c.l.b16 %v181
  %v362 = vunpack.c.h.b16 %v181
  %v363 = vunpack.c.l.b16 %v182
  %v364 = vunpack.c.h.b16 %v182
  %v365 = vunpack.c.l.b16 %v183
  %v366 = vunpack.c.h.b16 %v183
  %v367 = vunpack.c.l.b16 %v184
  %v368 = vunpack.c.h.b16 %v184
  %v369 = vunpack.c.l.b16 %v185
  %v370 = vunpack.c.h.b16 %v185
  %v371 = vunpack.c.l.b16 %v186
  %v372 = vunpack.c.h.b16 %v186
  %v373 = vunpack.c.l.b16 %v187
  %v374 = vunpack.c.h.b16 %v187
  %v375 = vunpack.c.l.b16 %v188
  %v376 = vunpack.c.h.b16 %v188
  %v377 = vunpack.c.l.b16 %v189
  %v378 = vunpack.c.h.b16 %v189
  %v379 = vunpack.c.l.b16 %v190
  %v380 = vunpack.c.h.b16 %v190
  %v381 = vunpack.c.l.b16 %v191
  %v382 = vunpack.c.h.b16 %v191
  %v383 = vunpack.c.l.b16 %v192
  %v384 = vunpack.c.h.b16 %v192
  %v385 = vunpack.c.l.b16 %v193
  %v386 = vunpack.c.h.b16 %v193
  %v387 = vunpack.c.l.b16 %v194
  %v388 = vunpack.c.h.b16 %v194
  %v389 = vunpack.c.l.b16 %v195
  %v390 = vunpack.c.h.b16 %v195
  %v391 = vunpack.c.l.b16 %v196
  %v392 = vunpack.c.h.b16 %v196
  %v393 = vunpack.c.l.b16 %v197
  %v394 = vunpack.c.h.b16 %v197
  %v395 = vunpack.c.l.b16 %v198
  %v396 = vunpack.c.h.b16 %v198
  %v397 = vunpack.c.l.b16 %v199
  %v398 = vunpack.c.h.b16 %v199
  %v399 = vunpack.c.l.b16 %v200
  %v400 = vunpack.c.h.b16 %v200
  %v401 = vunpack.c.l.b16 %v201
  %v402 = vunpack.c.h.b16 %v201
  %v403 = vunpack.c.l.b16 %v202
  %v404 = vunpack.c.h.b16 %v202
  %v405 = vunpack.c.l.b16 %v203
  %v406 = vunpack.c.h.b16 %v203
  %v407 = vunpack.c.l.b16 %v204
  %v408 = vunpack.c.h.b16 %v204
  %v409 = vunpack.c.l.b16 %v205
  %v410 = vunpack.c.h.b16 %v205
  %v411 = vunpack.c.l.b16 %v206
  %v412 = vunpack.c.h.b16 %v206
  %v413 = vunpack.c.l.b16 %v207
  %v414 = vunpack.c.h.b16 %v207
  %v415 = vunpack.c.l.b16 %v208
  %v416 = vunpack.c.h.b16 %v208
  %v417 = vunpack.c.l.b16 %v209
  %v418 = vunpack.c.h.b16 %v209
  %v419 = vunpack.c.l.b16 %v210
  %v420 = vunpack.c.h.b16 %v210
  %v421 = vunpack.c.l.b16 %v211
  %v422 = vunpack.c.h.b16 %v211
  %v423 = vpack.c.b16 %v297, %v295
  %v424 = vpack.c.b16 %v298, %v296
  %v425 = vpack.c.b16 %v301, %v299
  %v426 = vpack.c.b16 %v302, %v300
  %v427 = vpack.c.b16 %v305, %v303
  %v428 = vpack.c.b16 %v306, %v304
  %v429 = vpack.c.b16 %v309, %v307
  %v430 = vpack.c.b16 %v310, %v308
  %v431 = vpack.c.b16 %v313, %v311
  %v432 = vpack.c.b16 %v314, %v312
  %v433 = vpack.c.b16 %v317, %v315
  %v434 = vpack.c.b16 %v318, %v316
  %v435 = vpack.c.b16 %v321, %v319
  %v436 = vpack.c.b16 %v322, %v320
  %v437 = vpack.c.b16 %v325, %v323
  %v438 = vpack.c.b16 %v326, %v324
  %v439 = vpack.c.b16 %v329, %v327
  %v440 = vpack.c.b16 %v330, %v328
  %v441 = vpack.c.b16 %v333, %v331
  %v442 = vpack.c.b16 %v334, %v332
  %v443 = vpack.c.b16 %v337, %v335
  %v444 = vpack.c.b16 %v338, %v336
  %v445 = vpack.c.b16 %v341, %v339
  %v446 = vpack.c.b16 %v342, %v340
  %v447 = vpack.c.b16 %v345, %v343
  %v448 = vpack.c.b16 %v346, %v344
  %v449 = vpack.c.b16 %v349, %v347
  %v450 = vpack.c.b16 %v350, %v348
  %v451 = vpack.c.b16 %v353, %v351
  %v452 = vpack.c.b16 %v354, %v352
  %v453 = vpack.c.b16 %v357, %v355
  %v454 = vpack.c.b16 %v358, %v356
  %v455 = vpack.c.b16 %v361, %v359
  %v456 = vpack.c.b16 %v362, %v360
  %v457 = vpack.c.b16 %v365, %v363
  %v458 = vpack.c.b16 %v366, %v364
  %v459 = vpack.c.b16 %v369, %v367
  %v460 = vpack.c.b16 %v370, %v368
  %v461 = vpack.c.b16 %v373, %v371
  %v462 = vpack.c.b16 %v374, %v372
  %v463 = vpack.c.b16 %v377, %v375
  %v464 = vpack.c.b16 %v378, %v376
  %v465 = vpack.c.b16 %v381, %v379
  %v466 = vpack.c.b16 %v382, %v380
  %v467 = vpack.c.b16 %v385, %v383
  %v468 = vpack.c.b16 %v386, %v384
  %v469 = vpack.c.b16 %v389, %v387
  %v470 = vpack.c.b16 %v390, %v388
  %v471 = vpack.c.b16 %v393, %v391
  %v472 = vpack.c.b16 %v394, %v392
  %v473 = vpack.c.b16 %v397, %v395
  %v474 = vpack.c.b16 %v398, %v396
  %v475 = vpack.c.b16 %v401, %v399
  %v476 = vpack.c.b16 %v402, %v400
  %v477 = vpack.c.b16 %v405, %v403
  %v478 = vpack.c.b16 %v406, %v404
  %v479 = vpack.c.b16 %v409, %v407
  %v480 = vpack.c.b16 %v410, %v408
  %v481 = vpack.c.b16 %v413, %v411
  %v482 = vpack.c.b16 %v414, %v412
  %v483 = vpack.c.b16 %v417, %v415
  %v484 = vpack.c.b16 %v418, %v416
  %v485 = vpack.c.b16 %v421, %v419
  %v486 = vpack.c.b16 %v422, %v420
  %v538 = vunpack.c.l.b16 %v212
  %v539 = vunpack.c.l.b16 %v213
  %v540 = vunpack.c.l.b16 %v214
  %v541 = vunpack.c.l.b16 %v215
  %v542 = vunpack.c.l.b16 %v216
  %v543 = vunpack.c.l.b16 %v217
  %v544 = vunpack.c.l.b16 %v218
  %v545 = vunpack.c.l.b16 %v219
  %v546 = vunpack.c.l.b16 %v220
  %v547 = vunpack.c.l.b16 %v221
  %v548 = vunpack.c.l.b16 %v222
  %v549 = vunpack.c.l.b16 %v223
  %v550 = vunpack.c.l.b16 %v224
  %v551 = vunpack.c.l.b16 %v225
  %v552 = vunpack.c.l.b16 %v226
  %v553 = vunpack.c.l.b16 %v227
  %v554 = vunpack.c.l.b16 %v228
  %v555 = vunpack.c.l.b16 %v229
  %v556 = vunpack.c.l.b16 %v230
  %v557 = vpack.c.b16 %v539, %v538
  %v558 = vpack.c.b16 %v541, %v540
  %v559 = vpack.c.b16 %v543, %v542
  %v560 = vpack.c.b16 %v545, %v544
  %v561 = vpack.c.b16 %v547, %v546
  %v562 = vpack.c.b16 %v549, %v548
  %v563 = vpack.c.b16 %v551, %v550
  %v564 = vpack.c.b16 %v553, %v552
  %v565 = vpack.c.b16 %v555, %v554
  %v566 = vpack.c.b16 %v556, %v556
  %vm576 = vcmask 154624
  %v578 = vsel %vm576, %v424, 0
  %v581 = vsel %vm576, %v426, 0
  %v584 = vsel %vm576, %v428, 0
  %v587 = vsel %vm576, %v430, 0
  %v590 = vsel %vm576, %v432, 0
  %v593 = vsel %vm576, %v434, 0
  %v596 = vsel %vm576, %v436, 0
  %v599 = vsel %vm576, %v438, 0
  %v602 = vsel %vm576, %v440, 0
  %v605 = vsel %vm576, %v442, 0
  %v608 = vsel %vm576, %v444, 0
  %v611 = vsel %vm576, %v446, 0
  %v614 = vsel %vm576, %v448, 0
  %v617 = vsel %vm576, %v450, 0
  %v620 = vsel %vm576, %v452, 0
  %v623 = vsel %vm576, %v454, 0
  %v626 = vsel %vm576, %v456, 0
  %v629 = vsel %vm576, %v458, 0
  %v632 = vsel %vm576, %v460, 0
  %v635 = vsel %vm576, %v462, 0
  %v638 = vsel %vm576, %v464, 0
  %v641 = vsel %vm576, %v466, 0
  %v644 = vsel %vm576, %v468, 0
  %v647 = vsel %vm576, %v470, 0
  %v650 = vsel %vm576, %v472, 0
  %v653 = vsel %vm576, %v474, 0
  %v656 = vsel %vm576, %v476, 0
  %v659 = vsel %vm576, %v478, 0
  %v662 = vsel %vm576, %v480, 0
  %v665 = vsel %vm576, %v482, 0
  %v668 = vsel %vm576, %v484, 0
  %v671 = vsel %vm576, %v486, 0
  %vm673 = vcmask 1040384
  %vm674 = vcmask 1041408
  %v675 = vsel %vm673, 4294967295, 65535
  %v676 = vsel %vm674, %v675, 0
  %v678 = vand.u32 %v566, %v676
  %680 = vmatprep.subr.bf16.mxu0 0
  %681 = vmatpush1.bf16.msra.mxu0 %v564
  %682 = vmatprep.subr.bf16.mxu0 0
  %683 = vmatpush1.bf16.msra.mxu0 %v563
  %684 = vmatprep.subr.bf16.mxu0 0
  %685 = vmatpush1.bf16.msra.mxu0 %v562
  %686 = vmatprep.subr.bf16.mxu0 0
  %687 = vmatpush1.bf16.msra.mxu0 %v561
  %688 = vmatprep.subr.bf16.mxu0 0
  %689 = vmatpush1.bf16.msra.mxu0 %v560
  %690 = vmatprep.subr.bf16.mxu0 0
  %691 = vmatpush1.bf16.msra.mxu0 %v559
  %692 = vmatprep.subr.bf16.mxu0 0
  %693 = vmatpush1.bf16.msra.mxu0 %v558
  %694 = vmatprep.subr.bf16.mxu0 0
  %695 = vmatpush1.bf16.msra.mxu0 %v557
  %696 = vmatprep.subr.bf16.mxu0 0
  %697 = vmatpush2.bf16.msra.mxu0 0
  %698 = vmatprep.subr.bf16.mxu0 0
  %699 = vmatpush2.bf16.msra.mxu0 0
  %700 = vmatprep.subr.bf16.mxu0 0
  %701 = vmatpush2.bf16.msra.mxu0 0
  %702 = vmatprep.subr.bf16.mxu0 0
  %703 = vmatpush2.bf16.msra.mxu0 0
  %704 = vmatprep.subr.bf16.mxu0 0
  %705 = vmatpush2.bf16.msra.mxu0 0
  %706 = vmatprep.subr.bf16.mxu0 0
  %707 = vmatpush2.bf16.msra.mxu0 0
  %708 = vmatprep.subr.bf16.mxu0 0
  %709 = vmatpush2.bf16.msra.mxu0 %v678
  %710 = vmatprep.subr.bf16.mxu0 0
  %711 = vmatpush2.bf16.msra.mxu0 %v565
  %712 = vmatprep.mubr.bf16.mxu0 %v578
  %713 = vmatmul.mubr.bf16.gmra.mxu0 %v423
  %v714 = vpop.f32.mrf.mxu0
  %v715 = vadd.f32 0.0, %v714
  %v716 = vpop.f32.mrf.mxu0
  %v717 = vpop.f32.mrf.mxu0
  %v718 = vadd.f32 0.0, %v717
  %v719 = vpop.f32.mrf.mxu0
  %720 = vmatprep.mubr.bf16.mxu0 %v581
  %721 = vmatmul.mubr.bf16.gmra.mxu0 %v425
  %v722 = vpop.f32.mrf.mxu0
  %v723 = vadd.f32 0.0, %v722
  %v724 = vpop.f32.mrf.mxu0
  %v725 = vpop.f32.mrf.mxu0
  %v726 = vadd.f32 0.0, %v725
  %v727 = vpop.f32.mrf.mxu0
  %728 = vmatprep.mubr.bf16.mxu0 %v584
  %729 = vmatmul.mubr.bf16.gmra.mxu0 %v427
  %v730 = vpop.f32.mrf.mxu0
  %v731 = vadd.f32 0.0, %v730
  %v732 = vpop.f32.mrf.mxu0
  %v733 = vpop.f32.mrf.mxu0
  %v734 = vadd.f32 0.0, %v733
  %v735 = vpop.f32.mrf.mxu0
  %736 = vmatprep.mubr.bf16.mxu0 %v587
  %737 = vmatmul.mubr.bf16.gmra.mxu0 %v429
  %v738 = vpop.f32.mrf.mxu0
  %v739 = vadd.f32 0.0, %v738
  %v740 = vpop.f32.mrf.mxu0
  %v741 = vpop.f32.mrf.mxu0
  %v742 = vadd.f32 0.0, %v741
  %v743 = vpop.f32.mrf.mxu0
  %744 = vmatprep.mubr.bf16.mxu0 %v590
  %745 = vmatmul.mubr.bf16.gmra.mxu0 %v431
  %v746 = vpop.f32.mrf.mxu0
  %v747 = vadd.f32 0.0, %v746
  %v748 = vpop.f32.mrf.mxu0
  %v749 = vpop.f32.mrf.mxu0
  %v750 = vadd.f32 0.0, %v749
  %v751 = vpop.f32.mrf.mxu0
  %752 = vmatprep.mubr.bf16.mxu0 %v593
  %753 = vmatmul.mubr.bf16.gmra.mxu0 %v433
  %v754 = vpop.f32.mrf.mxu0
  %v755 = vadd.f32 0.0, %v754
  %v756 = vpop.f32.mrf.mxu0
  %v757 = vpop.f32.mrf.mxu0
  %v758 = vadd.f32 0.0, %v757
  %v759 = vpop.f32.mrf.mxu0
  %760 = vmatprep.mubr.bf16.mxu0 %v596
  %761 = vmatmul.mubr.bf16.gmra.mxu0 %v435
  %v762 = vpop.f32.mrf.mxu0
  %v763 = vadd.f32 0.0, %v762
  %v764 = vpop.f32.mrf.mxu0
  %v765 = vpop.f32.mrf.mxu0
  %v766 = vadd.f32 0.0, %v765
  %v767 = vpop.f32.mrf.mxu0
  %768 = vmatprep.mubr.bf16.mxu0 %v599
  %769 = vmatmul.mubr.bf16.gmra.mxu0 %v437
  %v770 = vpop.f32.mrf.mxu0
  %v771 = vadd.f32 0.0, %v770
  %v772 = vpop.f32.mrf.mxu0
  %v773 = vpop.f32.mrf.mxu0
  %v774 = vadd.f32 0.0, %v773
  %v775 = vpop.f32.mrf.mxu0
  %776 = vmatprep.mubr.bf16.mxu0 %v602
  %777 = vmatmul.mubr.bf16.gmra.mxu0 %v439
  %v778 = vpop.f32.mrf.mxu0
  %v779 = vadd.f32 0.0, %v778
  %v780 = vpop.f32.mrf.mxu0
  %v781 = vpop.f32.mrf.mxu0
  %v782 = vadd.f32 0.0, %v781
  %v783 = vpop.f32.mrf.mxu0
  %784 = vmatprep.mubr.bf16.mxu0 %v605
  %785 = vmatmul.mubr.bf16.gmra.mxu0 %v441
  %v786 = vpop.f32.mrf.mxu0
  %v787 = vadd.f32 0.0, %v786
  %v788 = vpop.f32.mrf.mxu0
  %v789 = vpop.f32.mrf.mxu0
  %v790 = vadd.f32 0.0, %v789
  %v791 = vpop.f32.mrf.mxu0
  %792 = vmatprep.mubr.bf16.mxu0 %v608
  %793 = vmatmul.mubr.bf16.gmra.mxu0 %v443
  %v794 = vpop.f32.mrf.mxu0
  %v795 = vadd.f32 0.0, %v794
  %v796 = vpop.f32.mrf.mxu0
  %v797 = vpop.f32.mrf.mxu0
  %v798 = vadd.f32 0.0, %v797
  %v799 = vpop.f32.mrf.mxu0
  %800 = vmatprep.mubr.bf16.mxu0 %v611
  %801 = vmatmul.mubr.bf16.gmra.mxu0 %v445
  %v802 = vpop.f32.mrf.mxu0
  %v803 = vadd.f32 0.0, %v802
  %v804 = vpop.f32.mrf.mxu0
  %v805 = vpop.f32.mrf.mxu0
  %v806 = vadd.f32 0.0, %v805
  %v807 = vpop.f32.mrf.mxu0
  %808 = vmatprep.mubr.bf16.mxu0 %v614
  %809 = vmatmul.mubr.bf16.gmra.mxu0 %v447
  %v810 = vpop.f32.mrf.mxu0
  %v811 = vadd.f32 0.0, %v810
  %v812 = vpop.f32.mrf.mxu0
  %v813 = vpop.f32.mrf.mxu0
  %v814 = vadd.f32 0.0, %v813
  %v815 = vpop.f32.mrf.mxu0
  %816 = vmatprep.mubr.bf16.mxu0 %v617
  %817 = vmatmul.mubr.bf16.gmra.mxu0 %v449
  %v818 = vpop.f32.mrf.mxu0
  %v819 = vadd.f32 0.0, %v818
  %v820 = vpop.f32.mrf.mxu0
  %v821 = vpop.f32.mrf.mxu0
  %v822 = vadd.f32 0.0, %v821
  %v823 = vpop.f32.mrf.mxu0
  %824 = vmatprep.mubr.bf16.mxu0 %v620
  %825 = vmatmul.mubr.bf16.gmra.mxu0 %v451
  %v826 = vpop.f32.mrf.mxu0
  %v827 = vadd.f32 0.0, %v826
  %v828 = vpop.f32.mrf.mxu0
  %v829 = vpop.f32.mrf.mxu0
  %v830 = vadd.f32 0.0, %v829
  %v831 = vpop.f32.mrf.mxu0
  %832 = vmatprep.mubr.bf16.mxu0 %v623
  %833 = vmatmul.mubr.bf16.gmra.mxu0 %v453
  %v834 = vpop.f32.mrf.mxu0
  %v835 = vadd.f32 0.0, %v834
  %v836 = vpop.f32.mrf.mxu0
  %v837 = vpop.f32.mrf.mxu0
  %v838 = vadd.f32 0.0, %v837
  %v839 = vpop.f32.mrf.mxu0
  %840 = vmatprep.mubr.bf16.mxu0 %v626
  %841 = vmatmul.mubr.bf16.gmra.mxu0 %v455
  %v842 = vpop.f32.mrf.mxu0
  %v843 = vadd.f32 0.0, %v842
  %v844 = vpop.f32.mrf.mxu0
  %v845 = vpop.f32.mrf.mxu0
  %v846 = vadd.f32 0.0, %v845
  %v847 = vpop.f32.mrf.mxu0
  %848 = vmatprep.mubr.bf16.mxu0 %v629
  %849 = vmatmul.mubr.bf16.gmra.mxu0 %v457
  %v850 = vpop.f32.mrf.mxu0
  %v851 = vadd.f32 0.0, %v850
  %v852 = vpop.f32.mrf.mxu0
  %v853 = vpop.f32.mrf.mxu0
  %v854 = vadd.f32 0.0, %v853
  %v855 = vpop.f32.mrf.mxu0
  %856 = vmatprep.mubr.bf16.mxu0 %v632
  %857 = vmatmul.mubr.bf16.gmra.mxu0 %v459
  %v858 = vpop.f32.mrf.mxu0
  %v859 = vadd.f32 0.0, %v858
  %v860 = vpop.f32.mrf.mxu0
  %v861 = vpop.f32.mrf.mxu0
  %v862 = vadd.f32 0.0, %v861
  %v863 = vpop.f32.mrf.mxu0
  %864 = vmatprep.mubr.bf16.mxu0 %v635
  %865 = vmatmul.mubr.bf16.gmra.mxu0 %v461
  %v866 = vpop.f32.mrf.mxu0
  %v867 = vadd.f32 0.0, %v866
  %v868 = vpop.f32.mrf.mxu0
  %v869 = vpop.f32.mrf.mxu0
  %v870 = vadd.f32 0.0, %v869
  %v871 = vpop.f32.mrf.mxu0
  %872 = vmatprep.mubr.bf16.mxu0 %v638
  %873 = vmatmul.mubr.bf16.gmra.mxu0 %v463
  %v874 = vpop.f32.mrf.mxu0
  %v875 = vadd.f32 0.0, %v874
  %v876 = vpop.f32.mrf.mxu0
  %v877 = vpop.f32.mrf.mxu0
  %v878 = vadd.f32 0.0, %v877
  %v879 = vpop.f32.mrf.mxu0
  %880 = vmatprep.mubr.bf16.mxu0 %v641
  %881 = vmatmul.mubr.bf16.gmra.mxu0 %v465
  %v882 = vpop.f32.mrf.mxu0
  %v883 = vadd.f32 0.0, %v882
  %v884 = vpop.f32.mrf.mxu0
  %v885 = vpop.f32.mrf.mxu0
  %v886 = vadd.f32 0.0, %v885
  %v887 = vpop.f32.mrf.mxu0
  %888 = vmatprep.mubr.bf16.mxu0 %v644
  %889 = vmatmul.mubr.bf16.gmra.mxu0 %v467
  %v890 = vpop.f32.mrf.mxu0
  %v891 = vadd.f32 0.0, %v890
  %v892 = vpop.f32.mrf.mxu0
  %v893 = vpop.f32.mrf.mxu0
  %v894 = vadd.f32 0.0, %v893
  %v895 = vpop.f32.mrf.mxu0
  %896 = vmatprep.mubr.bf16.mxu0 %v647
  %897 = vmatmul.mubr.bf16.gmra.mxu0 %v469
  %v898 = vpop.f32.mrf.mxu0
  %v899 = vadd.f32 0.0, %v898
  %v900 = vpop.f32.mrf.mxu0
  %v901 = vpop.f32.mrf.mxu0
  %v902 = vadd.f32 0.0, %v901
  %v903 = vpop.f32.mrf.mxu0
  %904 = vmatprep.mubr.bf16.mxu0 %v650
  %905 = vmatmul.mubr.bf16.gmra.mxu0 %v471
  %v906 = vpop.f32.mrf.mxu0
  %v907 = vadd.f32 0.0, %v906
  %v908 = vpop.f32.mrf.mxu0
  %v909 = vpop.f32.mrf.mxu0
  %v910 = vadd.f32 0.0, %v909
  %v911 = vpop.f32.mrf.mxu0
  %912 = vmatprep.mubr.bf16.mxu0 %v653
  %913 = vmatmul.mubr.bf16.gmra.mxu0 %v473
  %v914 = vpop.f32.mrf.mxu0
  %v915 = vadd.f32 0.0, %v914
  %v916 = vpop.f32.mrf.mxu0
  %v917 = vpop.f32.mrf.mxu0
  %v918 = vadd.f32 0.0, %v917
  %v919 = vpop.f32.mrf.mxu0
  %920 = vmatprep.mubr.bf16.mxu0 %v656
  %921 = vmatmul.mubr.bf16.gmra.mxu0 %v475
  %v922 = vpop.f32.mrf.mxu0
  %v923 = vadd.f32 0.0, %v922
  %v924 = vpop.f32.mrf.mxu0
  %v925 = vpop.f32.mrf.mxu0
  %v926 = vadd.f32 0.0, %v925
  %v927 = vpop.f32.mrf.mxu0
  %928 = vmatprep.mubr.bf16.mxu0 %v659
  %929 = vmatmul.mubr.bf16.gmra.mxu0 %v477
  %v930 = vpop.f32.mrf.mxu0
  %v931 = vadd.f32 0.0, %v930
  %v932 = vpop.f32.mrf.mxu0
  %v933 = vpop.f32.mrf.mxu0
  %v934 = vadd.f32 0.0, %v933
  %v935 = vpop.f32.mrf.mxu0
  %936 = vmatprep.mubr.bf16.mxu0 %v662
  %937 = vmatmul.mubr.bf16.gmra.mxu0 %v479
  %v938 = vpop.f32.mrf.mxu0
  %v939 = vadd.f32 0.0, %v938
  %v940 = vpop.f32.mrf.mxu0
  %v941 = vpop.f32.mrf.mxu0
  %v942 = vadd.f32 0.0, %v941
  %v943 = vpop.f32.mrf.mxu0
  %944 = vmatprep.mubr.bf16.mxu0 %v665
  %945 = vmatmul.mubr.bf16.gmra.mxu0 %v481
  %v946 = vpop.f32.mrf.mxu0
  %v947 = vadd.f32 0.0, %v946
  %v948 = vpop.f32.mrf.mxu0
  %v949 = vpop.f32.mrf.mxu0
  %v950 = vadd.f32 0.0, %v949
  %v951 = vpop.f32.mrf.mxu0
  %952 = vmatprep.mubr.bf16.mxu0 %v668
  %953 = vmatmul.mubr.bf16.gmra.mxu0 %v483
  %v954 = vpop.f32.mrf.mxu0
  %v955 = vadd.f32 0.0, %v954
  %v956 = vpop.f32.mrf.mxu0
  %v957 = vpop.f32.mrf.mxu0
  %v958 = vadd.f32 0.0, %v957
  %v959 = vpop.f32.mrf.mxu0
  %960 = vmatprep.mubr.bf16.mxu0 %v671
  %961 = vmatmul.mubr.bf16.gmra.mxu0 %v485
  %v962 = vpop.f32.mrf.mxu0
  %v963 = vadd.f32 0.0, %v962
  %v964 = vpop.f32.mrf.mxu0
  %v965 = vpop.f32.mrf.mxu0
  %v966 = vadd.f32 0.0, %v965
  %v967 = vpop.f32.mrf.mxu0
  %968 = vdwg.mxu0
  %v969 = vadd.f32 %v84, %v715
  %v970 = vadd.f32 %v85, %v718
  %v971 = vadd.f32 %v86, %v723
  %v972 = vadd.f32 %v87, %v726
  %v973 = vadd.f32 %v88, %v731
  %v974 = vadd.f32 %v89, %v734
  %v975 = vadd.f32 %v90, %v739
  %v976 = vadd.f32 %v91, %v742
  %v977 = vadd.f32 %v92, %v747
  %v978 = vadd.f32 %v93, %v750
  %v979 = vadd.f32 %v94, %v755
  %v980 = vadd.f32 %v95, %v758
  %v981 = vadd.f32 %v96, %v763
  %v982 = vadd.f32 %v97, %v766
  %v983 = vadd.f32 %v98, %v771
  %v984 = vadd.f32 %v99, %v774
  %v985 = vadd.f32 %v100, %v779
  %v986 = vadd.f32 %v101, %v782
  %v987 = vadd.f32 %v102, %v787
  %v988 = vadd.f32 %v103, %v790
  %v989 = vadd.f32 %v104, %v795
  %v990 = vadd.f32 %v105, %v798
  %v991 = vadd.f32 %v106, %v803
  %v992 = vadd.f32 %v107, %v806
  %v993 = vadd.f32 %v108, %v811
  %v994 = vadd.f32 %v109, %v814
  %v995 = vadd.f32 %v110, %v819
  %v996 = vadd.f32 %v111, %v822
  %v997 = vadd.f32 %v112, %v827
  %v998 = vadd.f32 %v113, %v830
  %v999 = vadd.f32 %v114, %v835
  %v1000 = vadd.f32 %v115, %v838
  %v1001 = vadd.f32 %v116, %v843
  %v1002 = vadd.f32 %v117, %v846
  %v1003 = vadd.f32 %v118, %v851
  %v1004 = vadd.f32 %v119, %v854
  %v1005 = vadd.f32 %v120, %v859
  %v1006 = vadd.f32 %v121, %v862
  %v1007 = vadd.f32 %v122, %v867
  %v1008 = vadd.f32 %v123, %v870
  %v1009 = vadd.f32 %v124, %v875
  %v1010 = vadd.f32 %v125, %v878
  %v1011 = vadd.f32 %v126, %v883
  %v1012 = vadd.f32 %v127, %v886
  %v1013 = vadd.f32 %v128, %v891
  %v1014 = vadd.f32 %v129, %v894
  %v1015 = vadd.f32 %v130, %v899
  %v1016 = vadd.f32 %v131, %v902
  %v1017 = vadd.f32 %v132, %v907
  %v1018 = vadd.f32 %v133, %v910
  %v1019 = vadd.f32 %v134, %v915
  %v1020 = vadd.f32 %v135, %v918
  %v1021 = vadd.f32 %v136, %v923
  %v1022 = vadd.f32 %v137, %v926
  %v1023 = vadd.f32 %v138, %v931
  %v1024 = vadd.f32 %v139, %v934
  %v1025 = vadd.f32 %v140, %v939
  %v1026 = vadd.f32 %v141, %v942
  %v1027 = vadd.f32 %v142, %v947
  %v1028 = vadd.f32 %v143, %v950
  %v1029 = vadd.f32 %v144, %v955
  %v1030 = vadd.f32 %v145, %v958
  %v1031 = vadd.f32 %v146, %v963
  %v1032 = vadd.f32 %v147, %v966
  %vm1033 = vcmask 523264
  %1034 = vst.msk [vmem:[#allocation2] sm:$0xff] %vm1033, %v969
  %1035 = vst.msk [vmem:[#allocation2 + $0x8] sm:$0xff] %vm1033, %v970
  %1036 = vst.msk [vmem:[#allocation2 + $0x10] sm:$0xff] %vm1033, %v971
  %1037 = vst.msk [vmem:[#allocation2 + $0x18] sm:$0xff] %vm1033, %v972
  %1038 = vst.msk [vmem:[#allocation2 + $0x20] sm:$0xff] %vm1033, %v973
  %1039 = vst.msk [vmem:[#allocation2 + $0x28] sm:$0xff] %vm1033, %v974
  %1040 = vst.msk [vmem:[#allocation2 + $0x30] sm:$0xff] %vm1033, %v975
  %1041 = vst.msk [vmem:[#allocation2 + $0x38] sm:$0xff] %vm1033, %v976
  %1042 = vst.msk [vmem:[#allocation2 + $0x40] sm:$0xff] %vm1033, %v977
  %1043 = vst.msk [vmem:[#allocation2 + $0x48] sm:$0xff] %vm1033, %v978
  %1044 = vst.msk [vmem:[#allocation2 + $0x50] sm:$0xff] %vm1033, %v979
  %1045 = vst.msk [vmem:[#allocation2 + $0x58] sm:$0xff] %vm1033, %v980
  %1046 = vst.msk [vmem:[#allocation2 + $0x60] sm:$0xff] %vm1033, %v981
  %1047 = vst.msk [vmem:[#allocation2 + $0x68] sm:$0xff] %vm1033, %v982
  %1048 = vst.msk [vmem:[#allocation2 + $0x70] sm:$0xff] %vm1033, %v983
  %1049 = vst.msk [vmem:[#allocation2 + $0x78] sm:$0xff] %vm1033, %v984
  %1050 = vst.msk [vmem:[#allocation2 + $0x80] sm:$0xff] %vm1033, %v985
  %1051 = vst.msk [vmem:[#allocation2 + $0x88] sm:$0xff] %vm1033, %v986
  %1052 = vst.msk [vmem:[#allocation2 + $0x90] sm:$0xff] %vm1033, %v987
  %1053 = vst.msk [vmem:[#allocation2 + $0x98] sm:$0xff] %vm1033, %v988
  %1054 = vst.msk [vmem:[#allocation2 + $0xa0] sm:$0xff] %vm1033, %v989
  %1055 = vst.msk [vmem:[#allocation2 + $0xa8] sm:$0xff] %vm1033, %v990
  %1056 = vst.msk [vmem:[#allocation2 + $0xb0] sm:$0xff] %vm1033, %v991
  %1057 = vst.msk [vmem:[#allocation2 + $0xb8] sm:$0xff] %vm1033, %v992
  %1058 = vst.msk [vmem:[#allocation2 + $0xc0] sm:$0xff] %vm1033, %v993
  %1059 = vst.msk [vmem:[#allocation2 + $0xc8] sm:$0xff] %vm1033, %v994
  %1060 = vst.msk [vmem:[#allocation2 + $0xd0] sm:$0xff] %vm1033, %v995
  %1061 = vst.msk [vmem:[#allocation2 + $0xd8] sm:$0xff] %vm1033, %v996
  %1062 = vst.msk [vmem:[#allocation2 + $0xe0] sm:$0xff] %vm1033, %v997
  %1063 = vst.msk [vmem:[#allocation2 + $0xe8] sm:$0xff] %vm1033, %v998
  %1064 = vst.msk [vmem:[#allocation2 + $0xf0] sm:$0xff] %vm1033, %v999
  %1065 = vst.msk [vmem:[#allocation2 + $0xf8] sm:$0xff] %vm1033, %v1000
  %1066 = vst.msk [vmem:[#allocation2 + $0x100] sm:$0xff] %vm1033, %v1001
  %1067 = vst.msk [vmem:[#allocation2 + $0x108] sm:$0xff] %vm1033, %v1002
  %1068 = vst.msk [vmem:[#allocation2 + $0x110] sm:$0xff] %vm1033, %v1003
  %1069 = vst.msk [vmem:[#allocation2 + $0x118] sm:$0xff] %vm1033, %v1004
  %1070 = vst.msk [vmem:[#allocation2 + $0x120] sm:$0xff] %vm1033, %v1005
  %1071 = vst.msk [vmem:[#allocation2 + $0x128] sm:$0xff] %vm1033, %v1006
  %1072 = vst.msk [vmem:[#allocation2 + $0x130] sm:$0xff] %vm1033, %v1007
  %1073 = vst.msk [vmem:[#allocation2 + $0x138] sm:$0xff] %vm1033, %v1008
  %1074 = vst.msk [vmem:[#allocation2 + $0x140] sm:$0xff] %vm1033, %v1009
  %1075 = vst.msk [vmem:[#allocation2 + $0x148] sm:$0xff] %vm1033, %v1010
  %1076 = vst.msk [vmem:[#allocation2 + $0x150] sm:$0xff] %vm1033, %v1011
  %1077 = vst.msk [vmem:[#allocation2 + $0x158] sm:$0xff] %vm1033, %v1012
  %1078 = vst.msk [vmem:[#allocation2 + $0x160] sm:$0xff] %vm1033, %v1013
  %1079 = vst.msk [vmem:[#allocation2 + $0x168] sm:$0xff] %vm1033, %v1014
  %1080 = vst.msk [vmem:[#allocation2 + $0x170] sm:$0xff] %vm1033, %v1015
  %1081 = vst.msk [vmem:[#allocation2 + $0x178] sm:$0xff] %vm1033, %v1016
  %1082 = vst.msk [vmem:[#allocation2 + $0x180] sm:$0xff] %vm1033, %v1017
  %1083 = vst.msk [vmem:[#allocation2 + $0x188] sm:$0xff] %vm1033, %v1018
  %1084 = vst.msk [vmem:[#allocation2 + $0x190] sm:$0xff] %vm1033, %v1019
  %1085 = vst.msk [vmem:[#allocation2 + $0x198] sm:$0xff] %vm1033, %v1020
  %1086 = vst.msk [vmem:[#allocation2 + $0x1a0] sm:$0xff] %vm1033, %v1021
  %1087 = vst.msk [vmem:[#allocation2 + $0x1a8] sm:$0xff] %vm1033, %v1022
  %1088 = vst.msk [vmem:[#allocation2 + $0x1b0] sm:$0xff] %vm1033, %v1023
  %1089 = vst.msk [vmem:[#allocation2 + $0x1b8] sm:$0xff] %vm1033, %v1024
  %1090 = vst.msk [vmem:[#allocation2 + $0x1c0] sm:$0xff] %vm1033, %v1025
  %1091 = vst.msk [vmem:[#allocation2 + $0x1c8] sm:$0xff] %vm1033, %v1026
  %1092 = vst.msk [vmem:[#allocation2 + $0x1d0] sm:$0xff] %vm1033, %v1027
  %1093 = vst.msk [vmem:[#allocation2 + $0x1d8] sm:$0xff] %vm1033, %v1028
  %1094 = vst.msk [vmem:[#allocation2 + $0x1e0] sm:$0xff] %vm1033, %v1029
  %1095 = vst.msk [vmem:[#allocation2 + $0x1e8] sm:$0xff] %vm1033, %v1030
  %1096 = vst.msk [vmem:[#allocation2 + $0x1f0] sm:$0xff] %vm1033, %v1031
  %1097 = vst.msk [vmem:[#allocation2 + $0x1f8] sm:$0xff] %vm1033, %v1032
  // Predicated region
  $region18: #{_stem_stage.2} parent=0 // pred_check
    %p1098 = pneg %p15
  $region19: #{_stem_stage.2} parent=0 // pred_check_branch
    %1100 = sbr.rel (%p1098) target = $region21
  $region20: #{_stem_stage.2} parent=0 // pred_region
    %v1101 = vld [vmem:[#allocation2] sm:$0xff]
    %v1102 = vld [vmem:[#allocation2 + $0x8] sm:$0xff]
    %v1103 = vld [vmem:[#allocation2 + $0x10] sm:$0xff]
    %v1104 = vld [vmem:[#allocation2 + $0x18] sm:$0xff]
    %v1105 = vld [vmem:[#allocation2 + $0x20] sm:$0xff]
    %v1106 = vld [vmem:[#allocation2 + $0x28] sm:$0xff]
    %v1107 = vld [vmem:[#allocation2 + $0x30] sm:$0xff]
    %v1108 = vld [vmem:[#allocation2 + $0x38] sm:$0xff]
    %v1109 = vld [vmem:[#allocation2 + $0x40] sm:$0xff]
    %v1110 = vld [vmem:[#allocation2 + $0x48] sm:$0xff]
    %v1111 = vld [vmem:[#allocation2 + $0x50] sm:$0xff]
    %v1112 = vld [vmem:[#allocation2 + $0x58] sm:$0xff]
    %v1113 = vld [vmem:[#allocation2 + $0x60] sm:$0xff]
    %v1114 = vld [vmem:[#allocation2 + $0x68] sm:$0xff]
    %v1115 = vld [vmem:[#allocation2 + $0x70] sm:$0xff]
    %v1116 = vld [vmem:[#allocation2 + $0x78] sm:$0xff]
    %v1117 = vld [vmem:[#allocation2 + $0x80] sm:$0xff]
    %v1118 = vld [vmem:[#allocation2 + $0x88] sm:$0xff]
    %v1119 = vld [vmem:[#allocation2 + $0x90] sm:$0xff]
    %v1120 = vld [vmem:[#allocation2 + $0x98] sm:$0xff]
    %v1121 = vld [vmem:[#allocation2 + $0xa0] sm:$0xff]
    %v1122 = vld [vmem:[#allocation2 + $0xa8] sm:$0xff]
    %v1123 = vld [vmem:[#allocation2 + $0xb0] sm:$0xff]
    %v1124 = vld [vmem:[#allocation2 + $0xb8] sm:$0xff]
    %v1125 = vld [vmem:[#allocation2 + $0xc0] sm:$0xff]
    %v1126 = vld [vmem:[#allocation2 + $0xc8] sm:$0xff]
    %v1127 = vld [vmem:[#allocation2 + $0xd0] sm:$0xff]
    %v1128 = vld [vmem:[#allocation2 + $0xd8] sm:$0xff]
    %v1129 = vld [vmem:[#allocation2 + $0xe0] sm:$0xff]
    %v1130 = vld [vmem:[#allocation2 + $0xe8] sm:$0xff]
    %v1131 = vld [vmem:[#allocation2 + $0xf0] sm:$0xff]
    %v1132 = vld [vmem:[#allocation2 + $0xf8] sm:$0xff]
    %v1133 = vld [vmem:[#allocation2 + $0x100] sm:$0xff]
    %v1134 = vld [vmem:[#allocation2 + $0x108] sm:$0xff]
    %v1135 = vld [vmem:[#allocation2 + $0x110] sm:$0xff]
    %v1136 = vld [vmem:[#allocation2 + $0x118] sm:$0xff]
    %v1137 = vld [vmem:[#allocation2 + $0x120] sm:$0xff]
    %v1138 = vld [vmem:[#allocation2 + $0x128] sm:$0xff]
    %v1139 = vld [vmem:[#allocation2 + $0x130] sm:$0xff]
    %v1140 = vld [vmem:[#allocation2 + $0x138] sm:$0xff]
    %v1141 = vld [vmem:[#allocation2 + $0x140] sm:$0xff]
    %v1142 = vld [vmem:[#allocation2 + $0x148] sm:$0xff]
    %v1143 = vld [vmem:[#allocation2 + $0x150] sm:$0xff]
    %v1144 = vld [vmem:[#allocation2 + $0x158] sm:$0xff]
    %v1145 = vld [vmem:[#allocation2 + $0x160] sm:$0xff]
    %v1146 = vld [vmem:[#allocation2 + $0x168] sm:$0xff]
    %v1147 = vld [vmem:[#allocation2 + $0x170] sm:$0xff]
    %v1148 = vld [vmem:[#allocation2 + $0x178] sm:$0xff]
    %v1149 = vld [vmem:[#allocation2 + $0x180] sm:$0xff]
    %v1150 = vld [vmem:[#allocation2 + $0x188] sm:$0xff]
    %v1151 = vld [vmem:[#allocation2 + $0x190] sm:$0xff]
    %v1152 = vld [vmem:[#allocation2 + $0x198] sm:$0xff]
    %v1153 = vld [vmem:[#allocation2 + $0x1a0] sm:$0xff]
    %v1154 = vld [vmem:[#allocation2 + $0x1a8] sm:$0xff]
    %v1155 = vld [vmem:[#allocation2 + $0x1b0] sm:$0xff]
    %v1156 = vld [vmem:[#allocation2 + $0x1b8] sm:$0xff]
    %v1157 = vld [vmem:[#allocation2 + $0x1c0] sm:$0xff]
    %v1158 = vld [vmem:[#allocation2 + $0x1c8] sm:$0xff]
    %v1159 = vld [vmem:[#allocation2 + $0x1d0] sm:$0xff]
    %v1160 = vld [vmem:[#allocation2 + $0x1d8] sm:$0xff]
    %v1161 = vld [vmem:[#allocation2 + $0x1e0] sm:$0xff]
    %v1162 = vld [vmem:[#allocation2 + $0x1e8] sm:$0xff]
    %v1163 = vld [vmem:[#allocation2 + $0x1f0] sm:$0xff]
    %v1164 = vld [vmem:[#allocation2 + $0x1f8] sm:$0xff]
    %v1165 = vld [vmem:[%s2] sm:$0x1]
    %v1167 = vlaneseq
    %v1168 = vshrl.u32 %v1167, 7
    %v1169 = vsub.s32 0, %v1168
    %v1170 = vrot.slane %v1165, %v1169
    %v1172 = vadd.f32 %v1101, %v1170
    %v1173 = vadd.f32 %v1102, %v1170
    %v1174 = vadd.f32 %v1103, %v1170
    %v1175 = vadd.f32 %v1104, %v1170
    %v1176 = vadd.f32 %v1105, %v1170
    %v1177 = vadd.f32 %v1106, %v1170
    %v1178 = vadd.f32 %v1107, %v1170
    %v1179 = vadd.f32 %v1108, %v1170
    %v1180 = vadd.f32 %v1109, %v1170
    %v1181 = vadd.f32 %v1110, %v1170
    %v1182 = vadd.f32 %v1111, %v1170
    %v1183 = vadd.f32 %v1112, %v1170
    %v1184 = vadd.f32 %v1113, %v1170
    %v1185 = vadd.f32 %v1114, %v1170
    %v1186 = vadd.f32 %v1115, %v1170
    %v1187 = vadd.f32 %v1116, %v1170
    %v1188 = vadd.f32 %v1117, %v1170
    %v1189 = vadd.f32 %v1118, %v1170
    %v1190 = vadd.f32 %v1119, %v1170
    %v1191 = vadd.f32 %v1120, %v1170
    %v1192 = vadd.f32 %v1121, %v1170
    %v1193 = vadd.f32 %v1122, %v1170
    %v1194 = vadd.f32 %v1123, %v1170
    %v1195 = vadd.f32 %v1124, %v1170
    %v1196 = vadd.f32 %v1125, %v1170
    %v1197 = vadd.f32 %v1126, %v1170
    %v1198 = vadd.f32 %v1127, %v1170
    %v1199 = vadd.f32 %v1128, %v1170
    %v1200 = vadd.f32 %v1129, %v1170
    %v1201 = vadd.f32 %v1130, %v1170
    %v1202 = vadd.f32 %v1131, %v1170
    %v1203 = vadd.f32 %v1132, %v1170
    %v1204 = vadd.f32 %v1133, %v1170
    %v1205 = vadd.f32 %v1134, %v1170
    %v1206 = vadd.f32 %v1135, %v1170
    %v1207 = vadd.f32 %v1136, %v1170
    %v1208 = vadd.f32 %v1137, %v1170
    %v1209 = vadd.f32 %v1138, %v1170
    %v1210 = vadd.f32 %v1139, %v1170
    %v1211 = vadd.f32 %v1140, %v1170
    %v1212 = vadd.f32 %v1141, %v1170
    %v1213 = vadd.f32 %v1142, %v1170
    %v1214 = vadd.f32 %v1143, %v1170
    %v1215 = vadd.f32 %v1144, %v1170
    %v1216 = vadd.f32 %v1145, %v1170
    %v1217 = vadd.f32 %v1146, %v1170
    %v1218 = vadd.f32 %v1147, %v1170
    %v1219 = vadd.f32 %v1148, %v1170
    %v1220 = vadd.f32 %v1149, %v1170
    %v1221 = vadd.f32 %v1150, %v1170
    %v1222 = vadd.f32 %v1151, %v1170
    %v1223 = vadd.f32 %v1152, %v1170
    %v1224 = vadd.f32 %v1153, %v1170
    %v1225 = vadd.f32 %v1154, %v1170
    %v1226 = vadd.f32 %v1155, %v1170
    %v1227 = vadd.f32 %v1156, %v1170
    %v1228 = vadd.f32 %v1157, %v1170
    %v1229 = vadd.f32 %v1158, %v1170
    %v1230 = vadd.f32 %v1159, %v1170
    %v1231 = vadd.f32 %v1160, %v1170
    %v1232 = vadd.f32 %v1161, %v1170
    %v1233 = vadd.f32 %v1162, %v1170
    %v1234 = vadd.f32 %v1163, %v1170
    %v1235 = vadd.f32 %v1164, %v1170
    %v1236 = vmax.f32 %v1172, 0.0
    %v1237 = vmax.f32 %v1173, 0.0
    %v1238 = vmax.f32 %v1174, 0.0
    %v1239 = vmax.f32 %v1175, 0.0
    %v1240 = vmax.f32 %v1176, 0.0
    %v1241 = vmax.f32 %v1177, 0.0
    %v1242 = vmax.f32 %v1178, 0.0
    %v1243 = vmax.f32 %v1179, 0.0
    %v1244 = vmax.f32 %v1180, 0.0
    %v1245 = vmax.f32 %v1181, 0.0
    %v1246 = vmax.f32 %v1182, 0.0
    %v1247 = vmax.f32 %v1183, 0.0
    %v1248 = vmax.f32 %v1184, 0.0
    %v1249 = vmax.f32 %v1185, 0.0
    %v1250 = vmax.f32 %v1186, 0.0
    %v1251 = vmax.f32 %v1187, 0.0
    %v1252 = vmax.f32 %v1188, 0.0
    %v1253 = vmax.f32 %v1189, 0.0
    %v1254 = vmax.f32 %v1190, 0.0
    %v1255 = vmax.f32 %v1191, 0.0
    %v1256 = vmax.f32 %v1192, 0.0
    %v1257 = vmax.f32 %v1193, 0.0
    %v1258 = vmax.f32 %v1194, 0.0
    %v1259 = vmax.f32 %v1195, 0.0
    %v1260 = vmax.f32 %v1196, 0.0
    %v1261 = vmax.f32 %v1197, 0.0
    %v1262 = vmax.f32 %v1198, 0.0
    %v1263 = vmax.f32 %v1199, 0.0
    %v1264 = vmax.f32 %v1200, 0.0
    %v1265 = vmax.f32 %v1201, 0.0
    %v1266 = vmax.f32 %v1202, 0.0
    %v1267 = vmax.f32 %v1203, 0.0
    %v1268 = vmax.f32 %v1204, 0.0
    %v1269 = vmax.f32 %v1205, 0.0
    %v1270 = vmax.f32 %v1206, 0.0
    %v1271 = vmax.f32 %v1207, 0.0
    %v1272 = vmax.f32 %v1208, 0.0
    %v1273 = vmax.f32 %v1209, 0.0
    %v1274 = vmax.f32 %v1210, 0.0
    %v1275 = vmax.f32 %v1211, 0.0
    %v1276 = vmax.f32 %v1212, 0.0
    %v1277 = vmax.f32 %v1213, 0.0
    %v1278 = vmax.f32 %v1214, 0.0
    %v1279 = vmax.f32 %v1215, 0.0
    %v1280 = vmax.f32 %v1216, 0.0
    %v1281 = vmax.f32 %v1217, 0.0
    %v1282 = vmax.f32 %v1218, 0.0
    %v1283 = vmax.f32 %v1219, 0.0
    %v1284 = vmax.f32 %v1220, 0.0
    %v1285 = vmax.f32 %v1221, 0.0
    %v1286 = vmax.f32 %v1222, 0.0
    %v1287 = vmax.f32 %v1223, 0.0
    %v1288 = vmax.f32 %v1224, 0.0
    %v1289 = vmax.f32 %v1225, 0.0
    %v1290 = vmax.f32 %v1226, 0.0
    %v1291 = vmax.f32 %v1227, 0.0
    %v1292 = vmax.f32 %v1228, 0.0
    %v1293 = vmax.f32 %v1229, 0.0
    %v1294 = vmax.f32 %v1230, 0.0
    %v1295 = vmax.f32 %v1231, 0.0
    %v1296 = vmax.f32 %v1232, 0.0
    %v1297 = vmax.f32 %v1233, 0.0
    %v1298 = vmax.f32 %v1234, 0.0
    %v1299 = vmax.f32 %v1235, 0.0
    %v1300 = vpack.c.bf16 %v1237, %v1236
    %v1301 = vpack.c.bf16 %v1239, %v1238
    %v1302 = vpack.c.bf16 %v1241, %v1240
    %v1303 = vpack.c.bf16 %v1243, %v1242
    %v1304 = vpack.c.bf16 %v1245, %v1244
    %v1305 = vpack.c.bf16 %v1247, %v1246
    %v1306 = vpack.c.bf16 %v1249, %v1248
    %v1307 = vpack.c.bf16 %v1251, %v1250
    %v1308 = vpack.c.bf16 %v1253, %v1252
    %v1309 = vpack.c.bf16 %v1255, %v1254
    %v1310 = vpack.c.bf16 %v1257, %v1256
    %v1311 = vpack.c.bf16 %v1259, %v1258
    %v1312 = vpack.c.bf16 %v1261, %v1260
    %v1313 = vpack.c.bf16 %v1263, %v1262
    %v1314 = vpack.c.bf16 %v1265, %v1264
    %v1315 = vpack.c.bf16 %v1267, %v1266
    %v1316 = vpack.c.bf16 %v1269, %v1268
    %v1317 = vpack.c.bf16 %v1271, %v1270
    %v1318 = vpack.c.bf16 %v1273, %v1272
    %v1319 = vpack.c.bf16 %v1275, %v1274
    %v1320 = vpack.c.bf16 %v1277, %v1276
    %v1321 = vpack.c.bf16 %v1279, %v1278
    %v1322 = vpack.c.bf16 %v1281, %v1280
    %v1323 = vpack.c.bf16 %v1283, %v1282
    %v1324 = vpack.c.bf16 %v1285, %v1284
    %v1325 = vpack.c.bf16 %v1287, %v1286
    %v1326 = vpack.c.bf16 %v1289, %v1288
    %v1327 = vpack.c.bf16 %v1291, %v1290
    %v1328 = vpack.c.bf16 %v1293, %v1292
    %v1329 = vpack.c.bf16 %v1295, %v1294
    %v1330 = vpack.c.bf16 %v1297, %v1296
    %v1331 = vpack.c.bf16 %v1299, %v1298
    %v1364 = vunpack.c.l.b16 %v1300
    %v1365 = vunpack.c.h.b16 %v1300
    %v1366 = vunpack.c.l.b16 %v1301
    %v1367 = vunpack.c.h.b16 %v1301
    %v1368 = vunpack.c.l.b16 %v1302
    %v1369 = vunpack.c.h.b16 %v1302
    %v1370 = vunpack.c.l.b16 %v1303
    %v1371 = vunpack.c.h.b16 %v1303
    %v1372 = vunpack.c.l.b16 %v1304
    %v1373 = vunpack.c.h.b16 %v1304
    %v1374 = vunpack.c.l.b16 %v1305
    %v1375 = vunpack.c.h.b16 %v1305
    %v1376 = vunpack.c.l.b16 %v1306
    %v1377 = vunpack.c.h.b16 %v1306
    %v1378 = vunpack.c.l.b16 %v1307
    %v1379 = vunpack.c.h.b16 %v1307
    %v1380 = vunpack.c.l.b16 %v1308
    %v1381 = vunpack.c.h.b16 %v1308
    %v1382 = vunpack.c.l.b16 %v1309
    %v1383 = vunpack.c.h.b16 %v1309
    %v1384 = vunpack.c.l.b16 %v1310
    %v1385 = vunpack.c.h.b16 %v1310
    %v1386 = vunpack.c.l.b16 %v1311
    %v1387 = vunpack.c.h.b16 %v1311
    %v1388 = vunpack.c.l.b16 %v1312
    %v1389 = vunpack.c.h.b16 %v1312
    %v1390 = vunpack.c.l.b16 %v1313
    %v1391 = vunpack.c.h.b16 %v1313
    %v1392 = vunpack.c.l.b16 %v1314
    %v1393 = vunpack.c.h.b16 %v1314
    %v1394 = vunpack.c.l.b16 %v1315
    %v1395 = vunpack.c.h.b16 %v1315
    %v1396 = vunpack.c.l.b16 %v1316
    %v1397 = vunpack.c.h.b16 %v1316
    %v1398 = vunpack.c.l.b16 %v1317
    %v1399 = vunpack.c.h.b16 %v1317
    %v1400 = vunpack.c.l.b16 %v1318
    %v1401 = vunpack.c.h.b16 %v1318
    %v1402 = vunpack.c.l.b16 %v1319
    %v1403 = vunpack.c.h.b16 %v1319
    %v1404 = vunpack.c.l.b16 %v1320
    %v1405 = vunpack.c.h.b16 %v1320
    %v1406 = vunpack.c.l.b16 %v1321
    %v1407 = vunpack.c.h.b16 %v1321
    %v1408 = vunpack.c.l.b16 %v1322
    %v1409 = vunpack.c.h.b16 %v1322
    %v1410 = vunpack.c.l.b16 %v1323
    %v1411 = vunpack.c.h.b16 %v1323
    %v1412 = vunpack.c.l.b16 %v1324
    %v1413 = vunpack.c.h.b16 %v1324
    %v1414 = vunpack.c.l.b16 %v1325
    %v1415 = vunpack.c.h.b16 %v1325
    %v1416 = vunpack.c.l.b16 %v1326
    %v1417 = vunpack.c.h.b16 %v1326
    %v1418 = vunpack.c.l.b16 %v1327
    %v1419 = vunpack.c.h.b16 %v1327
    %v1420 = vunpack.c.l.b16 %v1328
    %v1421 = vunpack.c.h.b16 %v1328
    %v1422 = vunpack.c.l.b16 %v1329
    %v1423 = vunpack.c.h.b16 %v1329
    %v1424 = vunpack.c.l.b16 %v1330
    %v1425 = vunpack.c.h.b16 %v1330
    %v1426 = vunpack.c.l.b16 %v1331
    %v1427 = vunpack.c.h.b16 %v1331
    %v1428 = vpack.c.b16 %v1364, %v1364
    %v1429 = vpack.c.b16 %v1365, %v1365
    %v1430 = vpack.c.b16 %v1366, %v1366
    %v1431 = vpack.c.b16 %v1367, %v1367
    %v1432 = vpack.c.b16 %v1368, %v1368
    %v1433 = vpack.c.b16 %v1369, %v1369
    %v1434 = vpack.c.b16 %v1370, %v1370
    %v1435 = vpack.c.b16 %v1371, %v1371
    %v1436 = vpack.c.b16 %v1372, %v1372
    %v1437 = vpack.c.b16 %v1373, %v1373
    %v1438 = vpack.c.b16 %v1374, %v1374
    %v1439 = vpack.c.b16 %v1375, %v1375
    %v1440 = vpack.c.b16 %v1376, %v1376
    %v1441 = vpack.c.b16 %v1377, %v1377
    %v1442 = vpack.c.b16 %v1378, %v1378
    %v1443 = vpack.c.b16 %v1379, %v1379
    %v1444 = vpack.c.b16 %v1380, %v1380
    %v1445 = vpack.c.b16 %v1381, %v1381
    %v1446 = vpack.c.b16 %v1382, %v1382
    %v1447 = vpack.c.b16 %v1383, %v1383
    %v1448 = vpack.c.b16 %v1384, %v1384
    %v1449 = vpack.c.b16 %v1385, %v1385
    %v1450 = vpack.c.b16 %v1386, %v1386
    %v1451 = vpack.c.b16 %v1387, %v1387
    %v1452 = vpack.c.b16 %v1388, %v1388
    %v1453 = vpack.c.b16 %v1389, %v1389
    %v1454 = vpack.c.b16 %v1390, %v1390
    %v1455 = vpack.c.b16 %v1391, %v1391
    %v1456 = vpack.c.b16 %v1392, %v1392
    %v1457 = vpack.c.b16 %v1393, %v1393
    %v1458 = vpack.c.b16 %v1394, %v1394
    %v1459 = vpack.c.b16 %v1395, %v1395
    %v1460 = vpack.c.b16 %v1396, %v1396
    %v1461 = vpack.c.b16 %v1397, %v1397
    %v1462 = vpack.c.b16 %v1398, %v1398
    %v1463 = vpack.c.b16 %v1399, %v1399
    %v1464 = vpack.c.b16 %v1400, %v1400
    %v1465 = vpack.c.b16 %v1401, %v1401
    %v1466 = vpack.c.b16 %v1402, %v1402
    %v1467 = vpack.c.b16 %v1403, %v1403
    %v1468 = vpack.c.b16 %v1404, %v1404
    %v1469 = vpack.c.b16 %v1405, %v1405
    %v1470 = vpack.c.b16 %v1406, %v1406
    %v1471 = vpack.c.b16 %v1407, %v1407
    %v1472 = vpack.c.b16 %v1408, %v1408
    %v1473 = vpack.c.b16 %v1409, %v1409
    %v1474 = vpack.c.b16 %v1410, %v1410
    %v1475 = vpack.c.b16 %v1411, %v1411
    %v1476 = vpack.c.b16 %v1412, %v1412
    %v1477 = vpack.c.b16 %v1413, %v1413
    %v1478 = vpack.c.b16 %v1414, %v1414
    %v1479 = vpack.c.b16 %v1415, %v1415
    %v1480 = vpack.c.b16 %v1416, %v1416
    %v1481 = vpack.c.b16 %v1417, %v1417
    %v1482 = vpack.c.b16 %v1418, %v1418
    %v1483 = vpack.c.b16 %v1419, %v1419
    %v1484 = vpack.c.b16 %v1420, %v1420
    %v1485 = vpack.c.b16 %v1421, %v1421
    %v1486 = vpack.c.b16 %v1422, %v1422
    %v1487 = vpack.c.b16 %v1423, %v1423
    %v1488 = vpack.c.b16 %v1424, %v1424
    %v1489 = vpack.c.b16 %v1425, %v1425
    %v1490 = vpack.c.b16 %v1426, %v1426
    %v1491 = vpack.c.b16 %v1427, %v1427
    %vm1556 = vcmask 519168
    %1557 = vst.msk [vmem:[%s3] sm:$0xf] %vm1556, %v1428
    %1558 = vst.msk [vmem:[%s3 + $0x4] sm:$0xf] %vm1556, %v1429
    %1559 = vst.msk [vmem:[%s3 + $0x8] sm:$0xf] %vm1556, %v1430
    %1560 = vst.msk [vmem:[%s3 + $0xc] sm:$0xf] %vm1556, %v1431
    %1561 = vst.msk [vmem:[%s3 + $0x10] sm:$0xf] %vm1556, %v1432
    %1562 = vst.msk [vmem:[%s3 + $0x14] sm:$0xf] %vm1556, %v1433
    %1563 = vst.msk [vmem:[%s3 + $0x18] sm:$0xf] %vm1556, %v1434
    %1564 = vst.msk [vmem:[%s3 + $0x1c] sm:$0xf] %vm1556, %v1435
    %1565 = vst.msk [vmem:[%s3 + $0x20] sm:$0xf] %vm1556, %v1436
    %1566 = vst.msk [vmem:[%s3 + $0x24] sm:$0xf] %vm1556, %v1437
    %1567 = vst.msk [vmem:[%s3 + $0x28] sm:$0xf] %vm1556, %v1438
    %1568 = vst.msk [vmem:[%s3 + $0x2c] sm:$0xf] %vm1556, %v1439
    %1569 = vst.msk [vmem:[%s3 + $0x30] sm:$0xf] %vm1556, %v1440
    %1570 = vst.msk [vmem:[%s3 + $0x34] sm:$0xf] %vm1556, %v1441
    %1571 = vst.msk [vmem:[%s3 + $0x38] sm:$0xf] %vm1556, %v1442
    %1572 = vst.msk [vmem:[%s3 + $0x3c] sm:$0xf] %vm1556, %v1443
    %1573 = vst.msk [vmem:[%s3 + $0x40] sm:$0xf] %vm1556, %v1444
    %1574 = vst.msk [vmem:[%s3 + $0x44] sm:$0xf] %vm1556, %v1445
    %1575 = vst.msk [vmem:[%s3 + $0x48] sm:$0xf] %vm1556, %v1446
    %1576 = vst.msk [vmem:[%s3 + $0x4c] sm:$0xf] %vm1556, %v1447
    %1577 = vst.msk [vmem:[%s3 + $0x50] sm:$0xf] %vm1556, %v1448
    %1578 = vst.msk [vmem:[%s3 + $0x54] sm:$0xf] %vm1556, %v1449
    %1579 = vst.msk [vmem:[%s3 + $0x58] sm:$0xf] %vm1556, %v1450
    %1580 = vst.msk [vmem:[%s3 + $0x5c] sm:$0xf] %vm1556, %v1451
    %1581 = vst.msk [vmem:[%s3 + $0x60] sm:$0xf] %vm1556, %v1452
    %1582 = vst.msk [vmem:[%s3 + $0x64] sm:$0xf] %vm1556, %v1453
    %1583 = vst.msk [vmem:[%s3 + $0x68] sm:$0xf] %vm1556, %v1454
    %1584 = vst.msk [vmem:[%s3 + $0x6c] sm:$0xf] %vm1556, %v1455
    %1585 = vst.msk [vmem:[%s3 + $0x70] sm:$0xf] %vm1556, %v1456
    %1586 = vst.msk [vmem:[%s3 + $0x74] sm:$0xf] %vm1556, %v1457
    %1587 = vst.msk [vmem:[%s3 + $0x78] sm:$0xf] %vm1556, %v1458
    %1588 = vst.msk [vmem:[%s3 + $0x7c] sm:$0xf] %vm1556, %v1459
    %1589 = vst.msk [vmem:[%s3 + $0x80] sm:$0xf] %vm1556, %v1460
    %1590 = vst.msk [vmem:[%s3 + $0x84] sm:$0xf] %vm1556, %v1461
    %1591 = vst.msk [vmem:[%s3 + $0x88] sm:$0xf] %vm1556, %v1462
    %1592 = vst.msk [vmem:[%s3 + $0x8c] sm:$0xf] %vm1556, %v1463
    %1593 = vst.msk [vmem:[%s3 + $0x90] sm:$0xf] %vm1556, %v1464
    %1594 = vst.msk [vmem:[%s3 + $0x94] sm:$0xf] %vm1556, %v1465
    %1595 = vst.msk [vmem:[%s3 + $0x98] sm:$0xf] %vm1556, %v1466
    %1596 = vst.msk [vmem:[%s3 + $0x9c] sm:$0xf] %vm1556, %v1467
    %1597 = vst.msk [vmem:[%s3 + $0xa0] sm:$0xf] %vm1556, %v1468
    %1598 = vst.msk [vmem:[%s3 + $0xa4] sm:$0xf] %vm1556, %v1469
    %1599 = vst.msk [vmem:[%s3 + $0xa8] sm:$0xf] %vm1556, %v1470
    %1600 = vst.msk [vmem:[%s3 + $0xac] sm:$0xf] %vm1556, %v1471
    %1601 = vst.msk [vmem:[%s3 + $0xb0] sm:$0xf] %vm1556, %v1472
    %1602 = vst.msk [vmem:[%s3 + $0xb4] sm:$0xf] %vm1556, %v1473
    %1603 = vst.msk [vmem:[%s3 + $0xb8] sm:$0xf] %vm1556, %v1474
    %1604 = vst.msk [vmem:[%s3 + $0xbc] sm:$0xf] %vm1556, %v1475
    %1605 = vst.msk [vmem:[%s3 + $0xc0] sm:$0xf] %vm1556, %v1476
    %1606 = vst.msk [vmem:[%s3 + $0xc4] sm:$0xf] %vm1556, %v1477
    %1607 = vst.msk [vmem:[%s3 + $0xc8] sm:$0xf] %vm1556, %v1478
    %1608 = vst.msk [vmem:[%s3 + $0xcc] sm:$0xf] %vm1556, %v1479
    %1609 = vst.msk [vmem:[%s3 + $0xd0] sm:$0xf] %vm1556, %v1480
    %1610 = vst.msk [vmem:[%s3 + $0xd4] sm:$0xf] %vm1556, %v1481
    %1611 = vst.msk [vmem:[%s3 + $0xd8] sm:$0xf] %vm1556, %v1482
    %1612 = vst.msk [vmem:[%s3 + $0xdc] sm:$0xf] %vm1556, %v1483
    %1613 = vst.msk [vmem:[%s3 + $0xe0] sm:$0xf] %vm1556, %v1484
    %1614 = vst.msk [vmem:[%s3 + $0xe4] sm:$0xf] %vm1556, %v1485
    %1615 = vst.msk [vmem:[%s3 + $0xe8] sm:$0xf] %vm1556, %v1486
    %1616 = vst.msk [vmem:[%s3 + $0xec] sm:$0xf] %vm1556, %v1487
    %1617 = vst.msk [vmem:[%s3 + $0xf0] sm:$0xf] %vm1556, %v1488
    %1618 = vst.msk [vmem:[%s3 + $0xf4] sm:$0xf] %vm1556, %v1489
    %1619 = vst.msk [vmem:[%s3 + $0xf8] sm:$0xf] %vm1556, %v1490
    %1620 = vst.msk [vmem:[%s3 + $0xfc] sm:$0xf] %vm1556, %v1491
  $region21: #{_stem_stage.2} parent=0 // pred_fallthru
    _
  // Predicated region
  $region22: #{_stem_stage.2} parent=0 // pred_check
    _
  $region23: #{_stem_stage.2} parent=0 // pred_check_branch
    %1622 = sbr.rel (0) target = $region25
  $region24: #{_stem_stage.2} parent=0 // pred_region
    _
  $region25: #{_stem_stage.2} parent=0 // pred_fallthru
    _
  // Predicated region
  $region26: #{_stem_stage.2} parent=0 // pred_check
    _
  $region27: #{_stem_stage.2} parent=0 // pred_check_branch
    %1624 = sbr.rel (0) target = $region29
  $region28: #{_stem_stage.2} parent=0 // pred_region
    _
  $region29: #{_stem_stage.2} parent=0 // pred_fallthru
    _

</llo_original>
